<compile_context>
chip_gen: v7x
topology: tpu7x:2x2x1
jax: 0.10.0
libtpu: 0.0.40
codegen_flags: <defaults>
</compile_context>

<pallas_src>
import functools

import jax
import jax.numpy as jnp
from jax.experimental import pallas as pl
from jax.experimental.pallas import tpu as pltpu

LN_EPS = 1e-5
LANE = 128
SUBLANE = 8
MXU_M = 256          # preferred M-stripe granularity for large batch tiles
MEGACORE_MIN_HALF = 256   # only split across TCs if each half gets >= this


def _round_up(x, m):
    return (x + m - 1) // m * m


def _fused_layernorm(h, gamma, beta, true_d, *, relu, out_dtype):
    """LayerNorm over the last axis of f32 `h`, fused affine form.

    `h`, `gamma`, `beta` may be zero-padded past `true_d` lanes.  Sum-based
    moments divided by the true feature count give exact unpadded statistics,
    and (since gamma/beta are zero in the pad) padded output lanes stay zero.
    """
    inv_d = 1.0 / float(true_d)
    mu = jnp.sum(h, axis=-1, keepdims=True) * inv_d            # XLU reduce
    ex2 = jnp.sum(h * h, axis=-1, keepdims=True) * inv_d       # XLU reduce
    var = jnp.maximum(ex2 - mu * mu, 0.0)                      # clamp f32 cancellation
    scale = gamma * jax.lax.rsqrt(var + LN_EPS)                # EUP rsqrt
    shift = beta - mu * scale
    y = h * scale + shift                                      # one VALU sweep
    if relu:
        y = jnp.maximum(y, 0.0)
    return y.astype(out_dtype)


def _mlp_head_kernel(x_ref,
                     w1_ref, b1_ref, g1_ref, be1_ref,
                     w2_ref, b2_ref, g2_ref, be2_ref,
                     w3_ref, b3_ref, g3_ref, be3_ref,
                     o_ref, *, hidden_dim, out_dim):
    # bf16 operands on the MXU with f32 accumulation; LN / ReLU stay in f32.
    # NOTE: zero-padded batch rows are NOT zero after fc1 (they become b1,
    # then LN of the bias vector, ...).  They are sliced away by the wrapper;
    # do not rely on them being zero.
    x = x_ref[...]                                             # already bf16

    # fc1 -> norm1 -> ReLU   (Dropout(p=0.0) == identity, omitted)
    h = jnp.dot(x, w1_ref[...], preferred_element_type=jnp.float32) + b1_ref[...]
    h = _fused_layernorm(h, g1_ref[...], be1_ref[...], hidden_dim,
                         relu=True, out_dtype=jnp.bfloat16)

    # fc2 -> norm2 -> ReLU
    h = jnp.dot(h, w2_ref[...], preferred_element_type=jnp.float32) + b2_ref[...]
    h = _fused_layernorm(h, g2_ref[...], be2_ref[...], hidden_dim,
                         relu=True, out_dtype=jnp.bfloat16)

    # fc3 -> norm3
    h = jnp.dot(h, w3_ref[...], preferred_element_type=jnp.float32) + b3_ref[...]
    o_ref[...] = _fused_layernorm(h, g3_ref[...], be3_ref[...], out_dim,
                                  relu=False, out_dtype=o_ref.dtype)


def prepare_params(params, in_dim, hidden_dim, out_dim):
    """One-time host-side prep: zero-pad feature dims to lane (128) multiples
    and store matmul weights in bf16 (MXU-native, half the HBM/VMEM traffic).
    gamma/beta are zero-padded so padded lanes stay zero through each LN."""
    in_p = _round_up(in_dim, LANE)
    hid_p = _round_up(hidden_dim, LANE)
    out_p = _round_up(out_dim, LANE)

    def pad2(a, rows, cols):
        return jnp.pad(a, ((0, rows - a.shape[0]), (0, cols - a.shape[1])))

    prepped = {
        "w1": pad2(params["w1"], in_p, hid_p).astype(jnp.bfloat16),
        "b1": pad2(params["b1"], 1, hid_p),
        "g1": pad2(params["g1"], 1, hid_p),
        "be1": pad2(params["be1"], 1, hid_p),
        "w2": pad2(params["w2"], hid_p, hid_p).astype(jnp.bfloat16),
        "b2": pad2(params["b2"], 1, hid_p),
        "g2": pad2(params["g2"], 1, hid_p),
        "be2": pad2(params["be2"], 1, hid_p),
        "w3": pad2(params["w3"], hid_p, out_p).astype(jnp.bfloat16),
        "b3": pad2(params["b3"], 1, out_p),
        "g3": pad2(params["g3"], 1, out_p),
        "be3": pad2(params["be3"], 1, out_p),
    }
    meta = dict(in_dim=in_dim, hidden_dim=hidden_dim, out_dim=out_dim,
                in_p=in_p, hid_p=hid_p, out_p=out_p)
    return prepped, meta


def _vmem_budget_bytes():
    cap = 64 * 1024 * 1024  # conservative fallback (= v7x physical VMEM)
    try:
        cap = int(pltpu.get_tpu_info().vmem_capacity_bytes)
    except Exception:
        pass
    return (cap * 3) // 4   # ~48 MiB on v7x, ~96 MiB on v5e/v6e


def _num_tensorcores():
    """Best-effort TensorCore count (v7x: 2, v5e/v6e: 1). Defaults to 1."""
    try:
        info = pltpu.get_tpu_info()
        for attr in ("num_cores", "core_count", "num_tensorcores",
                     "tensorcores_per_chip"):
            v = getattr(info, attr, None)
            if v:
                return int(v)
    except Exception:
        pass
    return 1


def _choose_block_b(batch, in_p, hid_p, out_p, budget_bytes, *,
                    single_buffer_weights):
    """Largest batch tile that fits the VMEM budget, MXU-M aligned."""
    # Weights / LN vectors are resident across the grid (constant index maps).
    # With pl.Buffered(1) they are single-buffered; the fallback path keeps the
    # default double-buffering, so account x2 there.
    buf = 1 if single_buffer_weights else 2
    w_bytes = buf * 2 * (in_p * hid_p + hid_p * hid_p + hid_p * out_p)   # bf16
    vec_bytes = buf * 4 * (6 * hid_p + 3 * out_p)                        # f32
    resident = w_bytes + vec_bytes
    avail = budget_bytes - resident
    if avail <= 0:
        # TODO(synk): K-tiled contraction fallback (stream W blocks over a
        # second "arbitrary" grid axis) for hidden_dim past the resident-
        # weight ceiling; not needed at these shapes.
        raise ValueError("hidden_dim too large for resident-weight kernel; "
                         "an inner contraction tiling is required")
    # Per batch row: double-buffered bf16 x tile + double-buffered f32 out
    # tile + ~4 live f32 hidden-width intermediates inside the kernel body
    # (kept conservative on purpose; see 75% headroom in _vmem_budget_bytes).
    per_row = 2 * 2 * in_p + 2 * 4 * out_p + 4 * 4 * hid_p
    cap = 1024 if budget_bytes >= 96 * 1024 * 1024 else 512
    bb = avail // per_row
    bb = max(SUBLANE, min(cap, bb))
    if bb >= MXU_M:
        bb = bb // MXU_M * MXU_M          # full MXU M stripes
    else:
        bb = bb // SUBLANE * SUBLANE
    bb = min(bb, _round_up(batch, SUBLANE))
    return int(max(SUBLANE, bb))


@functools.partial(jax.jit,
                   static_argnames=("hidden_dim", "out_dim", "block_b",
                                    "vmem_limit", "single_buffer_weights"))
def _mlp_head_call(x, prepped, *, hidden_dim, out_dim, block_b, vmem_limit,
                   single_buffer_weights):
    B, in_dim = x.shape
    in_p = prepped["w1"].shape[0]
    hid_p = prepped["w1"].shape[1]
    out_p = prepped["w3"].shape[1]

    b_pad = _round_up(B, block_b)
    # bf16 x: halves the per-step x DMA and VMEM; the kernel used bf16 anyway.
    xp = jnp.pad(x, ((0, b_pad - B), (0, in_p - in_dim))).astype(jnp.bfloat16)

    def const_spec(shape):
        idx = lambda i: (0,) * len(shape)
        if single_buffer_weights:
            # Grid-invariant block: single-buffer (double-buffering a constant
            # block is pure VMEM waste).
            return pl.BlockSpec(shape, idx, pipeline_mode=pl.Buffered(1))
        return pl.BlockSpec(shape, idx)

    grid_spec = pltpu.PrefetchScalarGridSpec(
        num_scalar_prefetch=0,
        grid=(b_pad // block_b,),
        in_specs=[
            pl.BlockSpec((block_b, in_p), lambda i: (i, 0)),            # x tile
            const_spec((in_p, hid_p)), const_spec((1, hid_p)),          # fc1 W, b
            const_spec((1, hid_p)), const_spec((1, hid_p)),             # norm1 g, b
            const_spec((hid_p, hid_p)), const_spec((1, hid_p)),         # fc2 W, b
            const_spec((1, hid_p)), const_spec((1, hid_p)),             # norm2 g, b
            const_spec((hid_p, out_p)), const_spec((1, out_p)),         # fc3 W, b
            const_spec((1, out_p)), const_spec((1, out_p)),             # norm3 g, b
        ],
        out_specs=pl.BlockSpec((block_b, out_p), lambda i: (i, 0)),
    )

    flops = 2 * b_pad * (in_p * hid_p + hid_p * hid_p + hid_p * out_p)
    bytes_accessed = (2 * b_pad * in_p                                  # x bf16
                      + 2 * (in_p * hid_p + hid_p * hid_p + hid_p * out_p)
                      + 4 * (6 * hid_p + 3 * out_p)
                      + 4 * b_pad * out_p)                              # out f32
    cost = pl.CostEstimate(flops=int(flops),
                           transcendentals=int(3 * b_pad),
                           bytes_accessed=int(bytes_accessed))

    kernel = functools.partial(_mlp_head_kernel,
                               hidden_dim=hidden_dim, out_dim=out_dim)
    out_padded = pl.pallas_call(
        kernel,
        grid_spec=grid_spec,
        out_shape=jax.ShapeDtypeStruct((b_pad, out_p), jnp.float32),
        compiler_params=pltpu.CompilerParams(
            dimension_semantics=("parallel",),
            vmem_limit_bytes=int(vmem_limit)),
        cost_estimate=cost,
    )(xp,
      prepped["w1"], prepped["b1"], prepped["g1"], prepped["be1"],
      prepped["w2"], prepped["b2"], prepped["g2"], prepped["be2"],
      prepped["w3"], prepped["b3"], prepped["g3"], prepped["be3"])

    return out_padded[:B, :out_dim]


def mlp_projection_head(x, prepped, meta):
    """x: (B, in_dim) f32; prepped/meta from prepare_params."""
    budget = _vmem_budget_bytes()
    n_rows = _round_up(x.shape[0], SUBLANE)

    last_err = None
    for single_buffer in (True, False):
        try:
            block_b = _choose_block_b(x.shape[0], meta["in_p"], meta["hid_p"],
                                      meta["out_p"], budget,
                                      single_buffer_weights=single_buffer)
            # Megacore: force >= 2 grid steps only when the chip actually has
            # >1 TensorCore AND each half still gets a full-width M tile
            # (>= 256 rows); splitting small batches just makes skinny GEMVs.
            if (_num_tensorcores() >= 2
                    and n_rows <= block_b
                    and n_rows >= 2 * MEGACORE_MIN_HALF):
                block_b = _round_up((n_rows + 1) // 2, LANE)
            return _mlp_head_call(x, prepped,
                                  hidden_dim=meta["hidden_dim"],
                                  out_dim=meta["out_dim"],
                                  block_b=block_b,
                                  vmem_limit=budget,
                                  single_buffer_weights=single_buffer)
        except Exception as e:  # noqa: BLE001 - fall back to default buffering
            last_err = e
            if not single_buffer:
                raise
    raise last_err  # unreachable


def init_params(key, in_dim, hidden_dim, out_dim):
    """Deterministic synthetic parameters (no checkpoint load). Linear weights
    are stored pre-transposed as (in_features, out_features)."""
    ks = jax.random.split(key, 12)
    s = lambda fan_in: 1.0 / jnp.sqrt(fan_in)
    return {
        "w1": jax.random.uniform(ks[0], (in_dim, hidden_dim), jnp.float32,
                                 -s(in_dim), s(in_dim)),
        "b1": jax.random.uniform(ks[1], (1, hidden_dim), jnp.float32,
                                 -s(in_dim), s(in_dim)),
        "g1": 1.0 + 0.1 * jax.random.normal(ks[2], (1, hidden_dim), jnp.float32),
        "be1": 0.1 * jax.random.normal(ks[3], (1, hidden_dim), jnp.float32),
        "w2": jax.random.uniform(ks[4], (hidden_dim, hidden_dim), jnp.float32,
                                 -s(hidden_dim), s(hidden_dim)),
        "b2": jax.random.uniform(ks[5], (1, hidden_dim), jnp.float32,
                                 -s(hidden_dim), s(hidden_dim)),
        "g2": 1.0 + 0.1 * jax.random.normal(ks[6], (1, hidden_dim), jnp.float32),
        "be2": 0.1 * jax.random.normal(ks[7], (1, hidden_dim), jnp.float32),
        "w3": jax.random.uniform(ks[8], (hidden_dim, out_dim), jnp.float32,
                                 -s(hidden_dim), s(hidden_dim)),
        "b3": jax.random.uniform(ks[9], (1, out_dim), jnp.float32,
                                 -s(hidden_dim), s(hidden_dim)),
        "g3": 1.0 + 0.1 * jax.random.normal(ks[10], (1, out_dim), jnp.float32),
        "be3": 0.1 * jax.random.normal(ks[11], (1, out_dim), jnp.float32),
    }


def reference(x, p, *, matmul_dtype=jnp.float32):
    """Pure-JAX forward matching the PyTorch module (drop=0.0).
    matmul_dtype=bf16 mirrors the kernel's mixed-precision matmul recipe."""
    def ln(h, g, b):
        mu = h.mean(-1, keepdims=True)
        var = ((h - mu) ** 2).mean(-1, keepdims=True)
        return (h - mu) / jnp.sqrt(var + LN_EPS) * g + b

    def mm(a, w):
        return jnp.dot(a.astype(matmul_dtype), w.astype(matmul_dtype),
                       preferred_element_type=jnp.float32)

    h = jnp.maximum(ln(mm(x, p["w1"]) + p["b1"], p["g1"], p["be1"]), 0.0)
    h = jnp.maximum(ln(mm(h, p["w2"]) + p["b2"], p["g2"], p["be2"]), 0.0)
    return ln(mm(h, p["w3"]) + p["b3"], p["g3"], p["be3"])


if __name__ == "__main__":
    B, IN_DIM, HIDDEN_DIM, OUT_DIM = 16, 32, 64, 24

    key = jax.random.PRNGKey(0)
    kx, kp = jax.random.split(key)
    x = jax.random.normal(kx, (B, IN_DIM), jnp.float32)
    params = init_params(kp, IN_DIM, HIDDEN_DIM, OUT_DIM)

    prepped, meta = prepare_params(params, IN_DIM, HIDDEN_DIM, OUT_DIM)
    out = mlp_projection_head(x, prepped, meta)
    out = jax.block_until_ready(out)

    assert out.shape == (B, OUT_DIM)
    assert bool(jnp.all(jnp.isfinite(out)))

    # Tight check vs a reference using the same bf16-operand / f32-accum dots.
    ref_mixed = reference(x, params, matmul_dtype=jnp.bfloat16)
    assert jnp.allclose(out, ref_mixed, atol=2e-3, rtol=2e-3), \
        "mismatch vs mixed-precision reference"

    # Loose sanity check vs the pure-f32 forward (bf16 weights/activations are
    # the only deliberate deviation from the original f32 module).
    ref_f32 = reference(x, params, matmul_dtype=jnp.float32)
    assert jnp.allclose(out, ref_f32, atol=1e-1, rtol=1e-1), \
        "bf16 drift too large vs f32 reference"

    print("KERNEL_OK")
</pallas_src>

<mosaic_0001>
module attributes {stable_mosaic.version = 11 : i64} {
  func.func @_mlp_head_kernel(%arg0: i32, %arg1: memref<16x128xbf16, #tpu.memory_space<vmem>>, %arg2: memref<128x128xbf16, #tpu.memory_space<vmem>>, %arg3: memref<1x128xf32, #tpu.memory_space<vmem>>, %arg4: memref<1x128xf32, #tpu.memory_space<vmem>>, %arg5: memref<1x128xf32, #tpu.memory_space<vmem>>, %arg6: memref<128x128xbf16, #tpu.memory_space<vmem>>, %arg7: memref<1x128xf32, #tpu.memory_space<vmem>>, %arg8: memref<1x128xf32, #tpu.memory_space<vmem>>, %arg9: memref<1x128xf32, #tpu.memory_space<vmem>>, %arg10: memref<128x128xbf16, #tpu.memory_space<vmem>>, %arg11: memref<1x128xf32, #tpu.memory_space<vmem>>, %arg12: memref<1x128xf32, #tpu.memory_space<vmem>>, %arg13: memref<1x128xf32, #tpu.memory_space<vmem>>, %arg14: memref<16x128xf32, #tpu.memory_space<vmem>>) attributes {dimension_semantics = [#tpu.dimension_semantics<parallel>], iteration_bounds = array<i64: 1>, scalar_prefetch = 0 : i64, scratch_operands = 0 : i64, tpu.core_type = #tpu.core_type<tc>, window_params = [{transform_indices = @transform_0, window_bounds = array<i64: 16, 128>}, {pipeline_mode = #tpu.pipeline_mode<synchronous>, transform_indices = @transform_1, window_bounds = array<i64: 128, 128>}, {pipeline_mode = #tpu.pipeline_mode<synchronous>, transform_indices = @transform_2, window_bounds = array<i64: 1, 128>}, {pipeline_mode = #tpu.pipeline_mode<synchronous>, transform_indices = @transform_3, window_bounds = array<i64: 1, 128>}, {pipeline_mode = #tpu.pipeline_mode<synchronous>, transform_indices = @transform_4, window_bounds = array<i64: 1, 128>}, {pipeline_mode = #tpu.pipeline_mode<synchronous>, transform_indices = @transform_5, window_bounds = array<i64: 128, 128>}, {pipeline_mode = #tpu.pipeline_mode<synchronous>, transform_indices = @transform_6, window_bounds = array<i64: 1, 128>}, {pipeline_mode = #tpu.pipeline_mode<synchronous>, transform_indices = @transform_7, window_bounds = array<i64: 1, 128>}, {pipeline_mode = #tpu.pipeline_mode<synchronous>, transform_indices = @transform_8, window_bounds = array<i64: 1, 128>}, {pipeline_mode = #tpu.pipeline_mode<synchronous>, transform_indices = @transform_9, window_bounds = array<i64: 128, 128>}, {pipeline_mode = #tpu.pipeline_mode<synchronous>, transform_indices = @transform_10, window_bounds = array<i64: 1, 128>}, {pipeline_mode = #tpu.pipeline_mode<synchronous>, transform_indices = @transform_11, window_bounds = array<i64: 1, 128>}, {pipeline_mode = #tpu.pipeline_mode<synchronous>, transform_indices = @transform_12, window_bounds = array<i64: 1, 128>}, {transform_indices = @transform_13, window_bounds = array<i64: 16, 128>}]} {
    %c0 = arith.constant 0 : index
    %c0_0 = arith.constant 0 : index
    %0 = vector.load %arg1[%c0, %c0_0] : memref<16x128xbf16, #tpu.memory_space<vmem>>, vector<16x128xbf16>
    %c0_1 = arith.constant 0 : index
    %c0_2 = arith.constant 0 : index
    %1 = vector.load %arg2[%c0_1, %c0_2] : memref<128x128xbf16, #tpu.memory_space<vmem>>, vector<128x128xbf16>
    %cst = arith.constant dense<0.000000e+00> : vector<16x128xf32>
    %2 = tpu.matmul %0, %1, %cst {dimension_numbers = #tpu.dot_dimension_numbers<[1], [0], [0], [1], [0, 0, 1, 1], [], []>} : vector<16x128xbf16>, vector<128x128xbf16>, vector<16x128xf32> -> vector<16x128xf32>
    %c0_3 = arith.constant 0 : index
    %c0_4 = arith.constant 0 : index
    %3 = vector.load %arg3[%c0_3, %c0_4] : memref<1x128xf32, #tpu.memory_space<vmem>>, vector<1x128xf32>
    %4 = vector.broadcast %3 : vector<1x128xf32> to vector<16x128xf32>
    %5 = arith.addf %2, %4 : vector<16x128xf32>
    %c0_5 = arith.constant 0 : index
    %c0_6 = arith.constant 0 : index
    %6 = vector.load %arg4[%c0_5, %c0_6] : memref<1x128xf32, #tpu.memory_space<vmem>>, vector<1x128xf32>
    %c0_7 = arith.constant 0 : index
    %c0_8 = arith.constant 0 : index
    %7 = vector.load %arg5[%c0_7, %c0_8] : memref<1x128xf32, #tpu.memory_space<vmem>>, vector<1x128xf32>
    %cst_9 = arith.constant dense<0.000000e+00> : vector<16xf32>
    %8 = vector.multi_reduction <add>, %5, %cst_9 [1] : vector<16x128xf32> to vector<16xf32>
    %9 = vector.shape_cast %8 : vector<16xf32> to vector<16x1xf32>
    %cst_10 = arith.constant 1.562500e-02 : f32
    %10 = vector.broadcast %cst_10 : f32 to vector<16x1xf32>
    %11 = arith.mulf %9, %10 : vector<16x1xf32>
    %12 = arith.mulf %5, %5 : vector<16x128xf32>
    %cst_11 = arith.constant dense<0.000000e+00> : vector<16xf32>
    %13 = vector.multi_reduction <add>, %12, %cst_11 [1] : vector<16x128xf32> to vector<16xf32>
    %14 = vector.shape_cast %13 : vector<16xf32> to vector<16x1xf32>
    %cst_12 = arith.constant 1.562500e-02 : f32
    %15 = vector.broadcast %cst_12 : f32 to vector<16x1xf32>
    %16 = arith.mulf %14, %15 : vector<16x1xf32>
    %17 = arith.mulf %11, %11 : vector<16x1xf32>
    %18 = arith.subf %16, %17 : vector<16x1xf32>
    %cst_13 = arith.constant 0.000000e+00 : f32
    %19 = vector.broadcast %cst_13 : f32 to vector<16x1xf32>
    %20 = arith.maximumf %18, %19 : vector<16x1xf32>
    %cst_14 = arith.constant 9.99999974E-6 : f32
    %21 = vector.broadcast %cst_14 : f32 to vector<16x1xf32>
    %22 = arith.addf %20, %21 : vector<16x1xf32>
    %23 = math.rsqrt %22 : vector<16x1xf32>
    %24 = vector.broadcast %6 : vector<1x128xf32> to vector<16x128xf32>
    %25 = vector.broadcast %23 : vector<16x1xf32> to vector<16x128xf32>
    %26 = arith.mulf %24, %25 : vector<16x128xf32>
    %27 = vector.broadcast %11 : vector<16x1xf32> to vector<16x128xf32>
    %28 = arith.mulf %27, %26 : vector<16x128xf32>
    %29 = vector.broadcast %7 : vector<1x128xf32> to vector<16x128xf32>
    %30 = arith.subf %29, %28 : vector<16x128xf32>
    %31 = arith.mulf %5, %26 : vector<16x128xf32>
    %32 = arith.addf %31, %30 : vector<16x128xf32>
    %cst_15 = arith.constant 0.000000e+00 : f32
    %33 = vector.broadcast %cst_15 : f32 to vector<16x128xf32>
    %34 = arith.maximumf %32, %33 : vector<16x128xf32>
    %35 = arith.truncf %34 : vector<16x128xf32> to vector<16x128xbf16>
    %c0_16 = arith.constant 0 : index
    %c0_17 = arith.constant 0 : index
    %36 = vector.load %arg6[%c0_16, %c0_17] : memref<128x128xbf16, #tpu.memory_space<vmem>>, vector<128x128xbf16>
    %cst_18 = arith.constant dense<0.000000e+00> : vector<16x128xf32>
    %37 = tpu.matmul %35, %36, %cst_18 {dimension_numbers = #tpu.dot_dimension_numbers<[1], [0], [0], [1], [0, 0, 1, 1], [], []>} : vector<16x128xbf16>, vector<128x128xbf16>, vector<16x128xf32> -> vector<16x128xf32>
    %c0_19 = arith.constant 0 : index
    %c0_20 = arith.constant 0 : index
    %38 = vector.load %arg7[%c0_19, %c0_20] : memref<1x128xf32, #tpu.memory_space<vmem>>, vector<1x128xf32>
    %39 = vector.broadcast %38 : vector<1x128xf32> to vector<16x128xf32>
    %40 = arith.addf %37, %39 : vector<16x128xf32>
    %c0_21 = arith.constant 0 : index
    %c0_22 = arith.constant 0 : index
    %41 = vector.load %arg8[%c0_21, %c0_22] : memref<1x128xf32, #tpu.memory_space<vmem>>, vector<1x128xf32>
    %c0_23 = arith.constant 0 : index
    %c0_24 = arith.constant 0 : index
    %42 = vector.load %arg9[%c0_23, %c0_24] : memref<1x128xf32, #tpu.memory_space<vmem>>, vector<1x128xf32>
    %cst_25 = arith.constant dense<0.000000e+00> : vector<16xf32>
    %43 = vector.multi_reduction <add>, %40, %cst_25 [1] : vector<16x128xf32> to vector<16xf32>
    %44 = vector.shape_cast %43 : vector<16xf32> to vector<16x1xf32>
    %cst_26 = arith.constant 1.562500e-02 : f32
    %45 = vector.broadcast %cst_26 : f32 to vector<16x1xf32>
    %46 = arith.mulf %44, %45 : vector<16x1xf32>
    %47 = arith.mulf %40, %40 : vector<16x128xf32>
    %cst_27 = arith.constant dense<0.000000e+00> : vector<16xf32>
    %48 = vector.multi_reduction <add>, %47, %cst_27 [1] : vector<16x128xf32> to vector<16xf32>
    %49 = vector.shape_cast %48 : vector<16xf32> to vector<16x1xf32>
    %cst_28 = arith.constant 1.562500e-02 : f32
    %50 = vector.broadcast %cst_28 : f32 to vector<16x1xf32>
    %51 = arith.mulf %49, %50 : vector<16x1xf32>
    %52 = arith.mulf %46, %46 : vector<16x1xf32>
    %53 = arith.subf %51, %52 : vector<16x1xf32>
    %cst_29 = arith.constant 0.000000e+00 : f32
    %54 = vector.broadcast %cst_29 : f32 to vector<16x1xf32>
    %55 = arith.maximumf %53, %54 : vector<16x1xf32>
    %cst_30 = arith.constant 9.99999974E-6 : f32
    %56 = vector.broadcast %cst_30 : f32 to vector<16x1xf32>
    %57 = arith.addf %55, %56 : vector<16x1xf32>
    %58 = math.rsqrt %57 : vector<16x1xf32>
    %59 = vector.broadcast %41 : vector<1x128xf32> to vector<16x128xf32>
    %60 = vector.broadcast %58 : vector<16x1xf32> to vector<16x128xf32>
    %61 = arith.mulf %59, %60 : vector<16x128xf32>
    %62 = vector.broadcast %46 : vector<16x1xf32> to vector<16x128xf32>
    %63 = arith.mulf %62, %61 : vector<16x128xf32>
    %64 = vector.broadcast %42 : vector<1x128xf32> to vector<16x128xf32>
    %65 = arith.subf %64, %63 : vector<16x128xf32>
    %66 = arith.mulf %40, %61 : vector<16x128xf32>
    %67 = arith.addf %66, %65 : vector<16x128xf32>
    %cst_31 = arith.constant 0.000000e+00 : f32
    %68 = vector.broadcast %cst_31 : f32 to vector<16x128xf32>
    %69 = arith.maximumf %67, %68 : vector<16x128xf32>
    %70 = arith.truncf %69 : vector<16x128xf32> to vector<16x128xbf16>
    %c0_32 = arith.constant 0 : index
    %c0_33 = arith.constant 0 : index
    %71 = vector.load %arg10[%c0_32, %c0_33] : memref<128x128xbf16, #tpu.memory_space<vmem>>, vector<128x128xbf16>
    %cst_34 = arith.constant dense<0.000000e+00> : vector<16x128xf32>
    %72 = tpu.matmul %70, %71, %cst_34 {dimension_numbers = #tpu.dot_dimension_numbers<[1], [0], [0], [1], [0, 0, 1, 1], [], []>} : vector<16x128xbf16>, vector<128x128xbf16>, vector<16x128xf32> -> vector<16x128xf32>
    %c0_35 = arith.constant 0 : index
    %c0_36 = arith.constant 0 : index
    %73 = vector.load %arg11[%c0_35, %c0_36] : memref<1x128xf32, #tpu.memory_space<vmem>>, vector<1x128xf32>
    %74 = vector.broadcast %73 : vector<1x128xf32> to vector<16x128xf32>
    %75 = arith.addf %72, %74 : vector<16x128xf32>
    %c0_37 = arith.constant 0 : index
    %c0_38 = arith.constant 0 : index
    %76 = vector.load %arg12[%c0_37, %c0_38] : memref<1x128xf32, #tpu.memory_space<vmem>>, vector<1x128xf32>
    %c0_39 = arith.constant 0 : index
    %c0_40 = arith.constant 0 : index
    %77 = vector.load %arg13[%c0_39, %c0_40] : memref<1x128xf32, #tpu.memory_space<vmem>>, vector<1x128xf32>
    %cst_41 = arith.constant dense<0.000000e+00> : vector<16xf32>
    %78 = vector.multi_reduction <add>, %75, %cst_41 [1] : vector<16x128xf32> to vector<16xf32>
    %79 = vector.shape_cast %78 : vector<16xf32> to vector<16x1xf32>
    %cst_42 = arith.constant 0.0416666679 : f32
    %80 = vector.broadcast %cst_42 : f32 to vector<16x1xf32>
    %81 = arith.mulf %79, %80 : vector<16x1xf32>
    %82 = arith.mulf %75, %75 : vector<16x128xf32>
    %cst_43 = arith.constant dense<0.000000e+00> : vector<16xf32>
    %83 = vector.multi_reduction <add>, %82, %cst_43 [1] : vector<16x128xf32> to vector<16xf32>
    %84 = vector.shape_cast %83 : vector<16xf32> to vector<16x1xf32>
    %cst_44 = arith.constant 0.0416666679 : f32
    %85 = vector.broadcast %cst_44 : f32 to vector<16x1xf32>
    %86 = arith.mulf %84, %85 : vector<16x1xf32>
    %87 = arith.mulf %81, %81 : vector<16x1xf32>
    %88 = arith.subf %86, %87 : vector<16x1xf32>
    %cst_45 = arith.constant 0.000000e+00 : f32
    %89 = vector.broadcast %cst_45 : f32 to vector<16x1xf32>
    %90 = arith.maximumf %88, %89 : vector<16x1xf32>
    %cst_46 = arith.constant 9.99999974E-6 : f32
    %91 = vector.broadcast %cst_46 : f32 to vector<16x1xf32>
    %92 = arith.addf %90, %91 : vector<16x1xf32>
    %93 = math.rsqrt %92 : vector<16x1xf32>
    %94 = vector.broadcast %76 : vector<1x128xf32> to vector<16x128xf32>
    %95 = vector.broadcast %93 : vector<16x1xf32> to vector<16x128xf32>
    %96 = arith.mulf %94, %95 : vector<16x128xf32>
    %97 = vector.broadcast %81 : vector<16x1xf32> to vector<16x128xf32>
    %98 = arith.mulf %97, %96 : vector<16x128xf32>
    %99 = vector.broadcast %77 : vector<1x128xf32> to vector<16x128xf32>
    %100 = arith.subf %99, %98 : vector<16x128xf32>
    %101 = arith.mulf %75, %96 : vector<16x128xf32>
    %102 = arith.addf %101, %100 : vector<16x128xf32>
    %c0_47 = arith.constant 0 : index
    %c0_48 = arith.constant 0 : index
    %103 = vector.load %arg14[%c0_47, %c0_48] : memref<16x128xf32, #tpu.memory_space<vmem>>, vector<16x128xf32>
    tpu.vector_store %arg14[%c0_47, %c0_48], %102 {strides = array<i32>} : memref<16x128xf32, #tpu.memory_space<vmem>>, vector<16x128xf32>,
    return
  }
  func.func @transform_0(%arg0: i32) -> (i32, i32) {
    %c0_i32 = arith.constant 0 : i32
    %c0_i32_0 = arith.constant 0 : i32
    return %arg0, %c0_i32 : i32, i32
  }
  func.func @transform_1(%arg0: i32) -> (i32, i32) {
    %c0_i32 = arith.constant 0 : i32
    %c0_i32_0 = arith.constant 0 : i32
    %c0_i32_1 = arith.constant 0 : i32
    return %c0_i32, %c0_i32_0 : i32, i32
  }
  func.func @transform_2(%arg0: i32) -> (i32, i32) {
    %c0_i32 = arith.constant 0 : i32
    %c0_i32_0 = arith.constant 0 : i32
    %c0_i32_1 = arith.constant 0 : i32
    return %c0_i32, %c0_i32_0 : i32, i32
  }
  func.func @transform_3(%arg0: i32) -> (i32, i32) {
    %c0_i32 = arith.constant 0 : i32
    %c0_i32_0 = arith.constant 0 : i32
    %c0_i32_1 = arith.constant 0 : i32
    return %c0_i32, %c0_i32_0 : i32, i32
  }
  func.func @transform_4(%arg0: i32) -> (i32, i32) {
    %c0_i32 = arith.constant 0 : i32
    %c0_i32_0 = arith.constant 0 : i32
    %c0_i32_1 = arith.constant 0 : i32
    return %c0_i32, %c0_i32_0 : i32, i32
  }
  func.func @transform_5(%arg0: i32) -> (i32, i32) {
    %c0_i32 = arith.constant 0 : i32
    %c0_i32_0 = arith.constant 0 : i32
    %c0_i32_1 = arith.constant 0 : i32
    return %c0_i32, %c0_i32_0 : i32, i32
  }
  func.func @transform_6(%arg0: i32) -> (i32, i32) {
    %c0_i32 = arith.constant 0 : i32
    %c0_i32_0 = arith.constant 0 : i32
    %c0_i32_1 = arith.constant 0 : i32
    return %c0_i32, %c0_i32_0 : i32, i32
  }
  func.func @transform_7(%arg0: i32) -> (i32, i32) {
    %c0_i32 = arith.constant 0 : i32
    %c0_i32_0 = arith.constant 0 : i32
    %c0_i32_1 = arith.constant 0 : i32
    return %c0_i32, %c0_i32_0 : i32, i32
  }
  func.func @transform_8(%arg0: i32) -> (i32, i32) {
    %c0_i32 = arith.constant 0 : i32
    %c0_i32_0 = arith.constant 0 : i32
    %c0_i32_1 = arith.constant 0 : i32
    return %c0_i32, %c0_i32_0 : i32, i32
  }
  func.func @transform_9(%arg0: i32) -> (i32, i32) {
    %c0_i32 = arith.constant 0 : i32
    %c0_i32_0 = arith.constant 0 : i32
    %c0_i32_1 = arith.constant 0 : i32
    return %c0_i32, %c0_i32_0 : i32, i32
  }
  func.func @transform_10(%arg0: i32) -> (i32, i32) {
    %c0_i32 = arith.constant 0 : i32
    %c0_i32_0 = arith.constant 0 : i32
    %c0_i32_1 = arith.constant 0 : i32
    return %c0_i32, %c0_i32_0 : i32, i32
  }
  func.func @transform_11(%arg0: i32) -> (i32, i32) {
    %c0_i32 = arith.constant 0 : i32
    %c0_i32_0 = arith.constant 0 : i32
    %c0_i32_1 = arith.constant 0 : i32
    return %c0_i32, %c0_i32_0 : i32, i32
  }
  func.func @transform_12(%arg0: i32) -> (i32, i32) {
    %c0_i32 = arith.constant 0 : i32
    %c0_i32_0 = arith.constant 0 : i32
    %c0_i32_1 = arith.constant 0 : i32
    return %c0_i32, %c0_i32_0 : i32, i32
  }
  func.func @transform_13(%arg0: i32) -> (i32, i32) {
    %c0_i32 = arith.constant 0 : i32
    %c0_i32_0 = arith.constant 0 : i32
    return %arg0, %c0_i32 : i32, i32
  }
}

module attributes {stable_mosaic.version = 11 : i64} {
  func.func @_mlp_head_kernel(%arg0: i32, %arg1: memref<16x128xbf16, #tpu.memory_space<vmem>>, %arg2: memref<128x128xbf16, #tpu.memory_space<vmem>>, %arg3: memref<1x128xf32, #tpu.memory_space<vmem>>, %arg4: memref<1x128xf32, #tpu.memory_space<vmem>>, %arg5: memref<1x128xf32, #tpu.memory_space<vmem>>, %arg6: memref<128x128xbf16, #tpu.memory_space<vmem>>, %arg7: memref<1x128xf32, #tpu.memory_space<vmem>>, %arg8: memref<1x128xf32, #tpu.memory_space<vmem>>, %arg9: memref<1x128xf32, #tpu.memory_space<vmem>>, %arg10: memref<128x128xbf16, #tpu.memory_space<vmem>>, %arg11: memref<1x128xf32, #tpu.memory_space<vmem>>, %arg12: memref<1x128xf32, #tpu.memory_space<vmem>>, %arg13: memref<1x128xf32, #tpu.memory_space<vmem>>, %arg14: memref<16x128xf32, #tpu.memory_space<vmem>>) attributes {dimension_semantics = [#tpu.dimension_semantics<parallel>], iteration_bounds = array<i64: 1>, scalar_prefetch = 0 : i64, scratch_operands = 0 : i64, tpu.core_type = #tpu.core_type<tc>, window_params = [{transform_indices = @transform_0, window_bounds = array<i64: 16, 128>}, {pipeline_mode = #tpu.pipeline_mode<synchronous>, transform_indices = @transform_1, window_bounds = array<i64: 128, 128>}, {pipeline_mode = #tpu.pipeline_mode<synchronous>, transform_indices = @transform_2, window_bounds = array<i64: 1, 128>}, {pipeline_mode = #tpu.pipeline_mode<synchronous>, transform_indices = @transform_3, window_bounds = array<i64: 1, 128>}, {pipeline_mode = #tpu.pipeline_mode<synchronous>, transform_indices = @transform_4, window_bounds = array<i64: 1, 128>}, {pipeline_mode = #tpu.pipeline_mode<synchronous>, transform_indices = @transform_5, window_bounds = array<i64: 128, 128>}, {pipeline_mode = #tpu.pipeline_mode<synchronous>, transform_indices = @transform_6, window_bounds = array<i64: 1, 128>}, {pipeline_mode = #tpu.pipeline_mode<synchronous>, transform_indices = @transform_7, window_bounds = array<i64: 1, 128>}, {pipeline_mode = #tpu.pipeline_mode<synchronous>, transform_indices = @transform_8, window_bounds = array<i64: 1, 128>}, {pipeline_mode = #tpu.pipeline_mode<synchronous>, transform_indices = @transform_9, window_bounds = array<i64: 128, 128>}, {pipeline_mode = #tpu.pipeline_mode<synchronous>, transform_indices = @transform_10, window_bounds = array<i64: 1, 128>}, {pipeline_mode = #tpu.pipeline_mode<synchronous>, transform_indices = @transform_11, window_bounds = array<i64: 1, 128>}, {pipeline_mode = #tpu.pipeline_mode<synchronous>, transform_indices = @transform_12, window_bounds = array<i64: 1, 128>}, {transform_indices = @transform_13, window_bounds = array<i64: 16, 128>}]} {
    %c0 = arith.constant 0 : index
    %c0_0 = arith.constant 0 : index
    %0 = vector.load %arg1[%c0, %c0_0] : memref<16x128xbf16, #tpu.memory_space<vmem>>, vector<16x128xbf16>
    %c0_1 = arith.constant 0 : index
    %c0_2 = arith.constant 0 : index
    %1 = vector.load %arg2[%c0_1, %c0_2] : memref<128x128xbf16, #tpu.memory_space<vmem>>, vector<128x128xbf16>
    %cst = arith.constant dense<0.000000e+00> : vector<16x128xf32>
    %2 = tpu.matmul %0, %1, %cst {dimension_numbers = #tpu.dot_dimension_numbers<[1], [0], [0], [1], [0, 0, 1, 1], [], []>} : vector<16x128xbf16>, vector<128x128xbf16>, vector<16x128xf32> -> vector<16x128xf32>
    %c0_3 = arith.constant 0 : index
    %c0_4 = arith.constant 0 : index
    %3 = vector.load %arg3[%c0_3, %c0_4] : memref<1x128xf32, #tpu.memory_space<vmem>>, vector<1x128xf32>
    %4 = vector.broadcast %3 : vector<1x128xf32> to vector<16x128xf32>
    %5 = arith.addf %2, %4 : vector<16x128xf32>
    %c0_5 = arith.constant 0 : index
    %c0_6 = arith.constant 0 : index
    %6 = vector.load %arg4[%c0_5, %c0_6] : memref<1x128xf32, #tpu.memory_space<vmem>>, vector<1x128xf32>
    %c0_7 = arith.constant 0 : index
    %c0_8 = arith.constant 0 : index
    %7 = vector.load %arg5[%c0_7, %c0_8] : memref<1x128xf32, #tpu.memory_space<vmem>>, vector<1x128xf32>
    %cst_9 = arith.constant dense<0.000000e+00> : vector<16xf32>
    %8 = vector.multi_reduction <add>, %5, %cst_9 [1] : vector<16x128xf32> to vector<16xf32>
    %9 = vector.shape_cast %8 : vector<16xf32> to vector<16x1xf32>
    %cst_10 = arith.constant 1.562500e-02 : f32
    %10 = vector.broadcast %cst_10 : f32 to vector<16x1xf32>
    %11 = arith.mulf %9, %10 : vector<16x1xf32>
    %12 = arith.mulf %5, %5 : vector<16x128xf32>
    %cst_11 = arith.constant dense<0.000000e+00> : vector<16xf32>
    %13 = vector.multi_reduction <add>, %12, %cst_11 [1] : vector<16x128xf32> to vector<16xf32>
    %14 = vector.shape_cast %13 : vector<16xf32> to vector<16x1xf32>
    %cst_12 = arith.constant 1.562500e-02 : f32
    %15 = vector.broadcast %cst_12 : f32 to vector<16x1xf32>
    %16 = arith.mulf %14, %15 : vector<16x1xf32>
    %17 = arith.mulf %11, %11 : vector<16x1xf32>
    %18 = arith.subf %16, %17 : vector<16x1xf32>
    %cst_13 = arith.constant 0.000000e+00 : f32
    %19 = vector.broadcast %cst_13 : f32 to vector<16x1xf32>
    %20 = arith.maximumf %18, %19 : vector<16x1xf32>
    %cst_14 = arith.constant 9.99999974E-6 : f32
    %21 = vector.broadcast %cst_14 : f32 to vector<16x1xf32>
    %22 = arith.addf %20, %21 : vector<16x1xf32>
    %23 = math.rsqrt %22 : vector<16x1xf32>
    %24 = vector.broadcast %6 : vector<1x128xf32> to vector<16x128xf32>
    %25 = vector.broadcast %23 : vector<16x1xf32> to vector<16x128xf32>
    %26 = arith.mulf %24, %25 : vector<16x128xf32>
    %27 = vector.broadcast %11 : vector<16x1xf32> to vector<16x128xf32>
    %28 = arith.mulf %27, %26 : vector<16x128xf32>
    %29 = vector.broadcast %7 : vector<1x128xf32> to vector<16x128xf32>
    %30 = arith.subf %29, %28 : vector<16x128xf32>
    %31 = arith.mulf %5, %26 : vector<16x128xf32>
    %32 = arith.addf %31, %30 : vector<16x128xf32>
    %cst_15 = arith.constant 0.000000e+00 : f32
    %33 = vector.broadcast %cst_15 : f32 to vector<16x128xf32>
    %34 = arith.maximumf %32, %33 : vector<16x128xf32>
    %35 = arith.truncf %34 : vector<16x128xf32> to vector<16x128xbf16>
    %c0_16 = arith.constant 0 : index
    %c0_17 = arith.constant 0 : index
    %36 = vector.load %arg6[%c0_16, %c0_17] : memref<128x128xbf16, #tpu.memory_space<vmem>>, vector<128x128xbf16>
    %cst_18 = arith.constant dense<0.000000e+00> : vector<16x128xf32>
    %37 = tpu.matmul %35, %36, %cst_18 {dimension_numbers = #tpu.dot_dimension_numbers<[1], [0], [0], [1], [0, 0, 1, 1], [], []>} : vector<16x128xbf16>, vector<128x128xbf16>, vector<16x128xf32> -> vector<16x128xf32>
    %c0_19 = arith.constant 0 : index
    %c0_20 = arith.constant 0 : index
    %38 = vector.load %arg7[%c0_19, %c0_20] : memref<1x128xf32, #tpu.memory_space<vmem>>, vector<1x128xf32>
    %39 = vector.broadcast %38 : vector<1x128xf32> to vector<16x128xf32>
    %40 = arith.addf %37, %39 : vector<16x128xf32>
    %c0_21 = arith.constant 0 : index
    %c0_22 = arith.constant 0 : index
    %41 = vector.load %arg8[%c0_21, %c0_22] : memref<1x128xf32, #tpu.memory_space<vmem>>, vector<1x128xf32>
    %c0_23 = arith.constant 0 : index
    %c0_24 = arith.constant 0 : index
    %42 = vector.load %arg9[%c0_23, %c0_24] : memref<1x128xf32, #tpu.memory_space<vmem>>, vector<1x128xf32>
    %cst_25 = arith.constant dense<0.000000e+00> : vector<16xf32>
    %43 = vector.multi_reduction <add>, %40, %cst_25 [1] : vector<16x128xf32> to vector<16xf32>
    %44 = vector.shape_cast %43 : vector<16xf32> to vector<16x1xf32>
    %cst_26 = arith.constant 1.562500e-02 : f32
    %45 = vector.broadcast %cst_26 : f32 to vector<16x1xf32>
    %46 = arith.mulf %44, %45 : vector<16x1xf32>
    %47 = arith.mulf %40, %40 : vector<16x128xf32>
    %cst_27 = arith.constant dense<0.000000e+00> : vector<16xf32>
    %48 = vector.multi_reduction <add>, %47, %cst_27 [1] : vector<16x128xf32> to vector<16xf32>
    %49 = vector.shape_cast %48 : vector<16xf32> to vector<16x1xf32>
    %cst_28 = arith.constant 1.562500e-02 : f32
    %50 = vector.broadcast %cst_28 : f32 to vector<16x1xf32>
    %51 = arith.mulf %49, %50 : vector<16x1xf32>
    %52 = arith.mulf %46, %46 : vector<16x1xf32>
    %53 = arith.subf %51, %52 : vector<16x1xf32>
    %cst_29 = arith.constant 0.000000e+00 : f32
    %54 = vector.broadcast %cst_29 : f32 to vector<16x1xf32>
    %55 = arith.maximumf %53, %54 : vector<16x1xf32>
    %cst_30 = arith.constant 9.99999974E-6 : f32
    %56 = vector.broadcast %cst_30 : f32 to vector<16x1xf32>
    %57 = arith.addf %55, %56 : vector<16x1xf32>
    %58 = math.rsqrt %57 : vector<16x1xf32>
    %59 = vector.broadcast %41 : vector<1x128xf32> to vector<16x128xf32>
    %60 = vector.broadcast %58 : vector<16x1xf32> to vector<16x128xf32>
    %61 = arith.mulf %59, %60 : vector<16x128xf32>
    %62 = vector.broadcast %46 : vector<16x1xf32> to vector<16x128xf32>
    %63 = arith.mulf %62, %61 : vector<16x128xf32>
    %64 = vector.broadcast %42 : vector<1x128xf32> to vector<16x128xf32>
    %65 = arith.subf %64, %63 : vector<16x128xf32>
    %66 = arith.mulf %40, %61 : vector<16x128xf32>
    %67 = arith.addf %66, %65 : vector<16x128xf32>
    %cst_31 = arith.constant 0.000000e+00 : f32
    %68 = vector.broadcast %cst_31 : f32 to vector<16x128xf32>
    %69 = arith.maximumf %67, %68 : vector<16x128xf32>
    %70 = arith.truncf %69 : vector<16x128xf32> to vector<16x128xbf16>
    %c0_32 = arith.constant 0 : index
    %c0_33 = arith.constant 0 : index
    %71 = vector.load %arg10[%c0_32, %c0_33] : memref<128x128xbf16, #tpu.memory_space<vmem>>, vector<128x128xbf16>
    %cst_34 = arith.constant dense<0.000000e+00> : vector<16x128xf32>
    %72 = tpu.matmul %70, %71, %cst_34 {dimension_numbers = #tpu.dot_dimension_numbers<[1], [0], [0], [1], [0, 0, 1, 1], [], []>} : vector<16x128xbf16>, vector<128x128xbf16>, vector<16x128xf32> -> vector<16x128xf32>
    %c0_35 = arith.constant 0 : index
    %c0_36 = arith.constant 0 : index
    %73 = vector.load %arg11[%c0_35, %c0_36] : memref<1x128xf32, #tpu.memory_space<vmem>>, vector<1x128xf32>
    %74 = vector.broadcast %73 : vector<1x128xf32> to vector<16x128xf32>
    %75 = arith.addf %72, %74 : vector<16x128xf32>
    %c0_37 = arith.constant 0 : index
    %c0_38 = arith.constant 0 : index
    %76 = vector.load %arg12[%c0_37, %c0_38] : memref<1x128xf32, #tpu.memory_space<vmem>>, vector<1x128xf32>
    %c0_39 = arith.constant 0 : index
    %c0_40 = arith.constant 0 : index
    %77 = vector.load %arg13[%c0_39, %c0_40] : memref<1x128xf32, #tpu.memory_space<vmem>>, vector<1x128xf32>
    %cst_41 = arith.constant dense<0.000000e+00> : vector<16xf32>
    %78 = vector.multi_reduction <add>, %75, %cst_41 [1] : vector<16x128xf32> to vector<16xf32>
    %79 = vector.shape_cast %78 : vector<16xf32> to vector<16x1xf32>
    %cst_42 = arith.constant 0.0416666679 : f32
    %80 = vector.broadcast %cst_42 : f32 to vector<16x1xf32>
    %81 = arith.mulf %79, %80 : vector<16x1xf32>
    %82 = arith.mulf %75, %75 : vector<16x128xf32>
    %cst_43 = arith.constant dense<0.000000e+00> : vector<16xf32>
    %83 = vector.multi_reduction <add>, %82, %cst_43 [1] : vector<16x128xf32> to vector<16xf32>
    %84 = vector.shape_cast %83 : vector<16xf32> to vector<16x1xf32>
    %cst_44 = arith.constant 0.0416666679 : f32
    %85 = vector.broadcast %cst_44 : f32 to vector<16x1xf32>
    %86 = arith.mulf %84, %85 : vector<16x1xf32>
    %87 = arith.mulf %81, %81 : vector<16x1xf32>
    %88 = arith.subf %86, %87 : vector<16x1xf32>
    %cst_45 = arith.constant 0.000000e+00 : f32
    %89 = vector.broadcast %cst_45 : f32 to vector<16x1xf32>
    %90 = arith.maximumf %88, %89 : vector<16x1xf32>
    %cst_46 = arith.constant 9.99999974E-6 : f32
    %91 = vector.broadcast %cst_46 : f32 to vector<16x1xf32>
    %92 = arith.addf %90, %91 : vector<16x1xf32>
    %93 = math.rsqrt %92 : vector<16x1xf32>
    %94 = vector.broadcast %76 : vector<1x128xf32> to vector<16x128xf32>
    %95 = vector.broadcast %93 : vector<16x1xf32> to vector<16x128xf32>
    %96 = arith.mulf %94, %95 : vector<16x128xf32>
    %97 = vector.broadcast %81 : vector<16x1xf32> to vector<16x128xf32>
    %98 = arith.mulf %97, %96 : vector<16x128xf32>
    %99 = vector.broadcast %77 : vector<1x128xf32> to vector<16x128xf32>
    %100 = arith.subf %99, %98 : vector<16x128xf32>
    %101 = arith.mulf %75, %96 : vector<16x128xf32>
    %102 = arith.addf %101, %100 : vector<16x128xf32>
    %c0_47 = arith.constant 0 : index
    %c0_48 = arith.constant 0 : index
    %103 = vector.load %arg14[%c0_47, %c0_48] : memref<16x128xf32, #tpu.memory_space<vmem>>, vector<16x128xf32>
    tpu.vector_store %arg14[%c0_47, %c0_48], %102 {strides = array<i32>} : memref<16x128xf32, #tpu.memory_space<vmem>>, vector<16x128xf32>,
    return
  }
  func.func @transform_0(%arg0: i32) -> (i32, i32) {
    %c0_i32 = arith.constant 0 : i32
    %c0_i32_0 = arith.constant 0 : i32
    return %arg0, %c0_i32 : i32, i32
  }
  func.func @transform_1(%arg0: i32) -> (i32, i32) {
    %c0_i32 = arith.constant 0 : i32
    %c0_i32_0 = arith.constant 0 : i32
    %c0_i32_1 = arith.constant 0 : i32
    return %c0_i32, %c0_i32_0 : i32, i32
  }
  func.func @transform_2(%arg0: i32) -> (i32, i32) {
    %c0_i32 = arith.constant 0 : i32
    %c0_i32_0 = arith.constant 0 : i32
    %c0_i32_1 = arith.constant 0 : i32
    return %c0_i32, %c0_i32_0 : i32, i32
  }
  func.func @transform_3(%arg0: i32) -> (i32, i32) {
    %c0_i32 = arith.constant 0 : i32
    %c0_i32_0 = arith.constant 0 : i32
    %c0_i32_1 = arith.constant 0 : i32
    return %c0_i32, %c0_i32_0 : i32, i32
  }
  func.func @transform_4(%arg0: i32) -> (i32, i32) {
    %c0_i32 = arith.constant 0 : i32
    %c0_i32_0 = arith.constant 0 : i32
    %c0_i32_1 = arith.constant 0 : i32
    return %c0_i32, %c0_i32_0 : i32, i32
  }
  func.func @transform_5(%arg0: i32) -> (i32, i32) {
    %c0_i32 = arith.constant 0 : i32
    %c0_i32_0 = arith.constant 0 : i32
    %c0_i32_1 = arith.constant 0 : i32
    return %c0_i32, %c0_i32_0 : i32, i32
  }
  func.func @transform_6(%arg0: i32) -> (i32, i32) {
    %c0_i32 = arith.constant 0 : i32
    %c0_i32_0 = arith.constant 0 : i32
    %c0_i32_1 = arith.constant 0 : i32
    return %c0_i32, %c0_i32_0 : i32, i32
  }
  func.func @transform_7(%arg0: i32) -> (i32, i32) {
    %c0_i32 = arith.constant 0 : i32
    %c0_i32_0 = arith.constant 0 : i32
    %c0_i32_1 = arith.constant 0 : i32
    return %c0_i32, %c0_i32_0 : i32, i32
  }
  func.func @transform_8(%arg0: i32) -> (i32, i32) {
    %c0_i32 = arith.constant 0 : i32
    %c0_i32_0 = arith.constant 0 : i32
    %c0_i32_1 = arith.constant 0 : i32
    return %c0_i32, %c0_i32_0 : i32, i32
  }
  func.func @transform_9(%arg0: i32) -> (i32, i32) {
    %c0_i32 = arith.constant 0 : i32
    %c0_i32_0 = arith.constant 0 : i32
    %c0_i32_1 = arith.constant 0 : i32
    return %c0_i32, %c0_i32_0 : i32, i32
  }
  func.func @transform_10(%arg0: i32) -> (i32, i32) {
    %c0_i32 = arith.constant 0 : i32
    %c0_i32_0 = arith.constant 0 : i32
    %c0_i32_1 = arith.constant 0 : i32
    return %c0_i32, %c0_i32_0 : i32, i32
  }
  func.func @transform_11(%arg0: i32) -> (i32, i32) {
    %c0_i32 = arith.constant 0 : i32
    %c0_i32_0 = arith.constant 0 : i32
    %c0_i32_1 = arith.constant 0 : i32
    return %c0_i32, %c0_i32_0 : i32, i32
  }
  func.func @transform_12(%arg0: i32) -> (i32, i32) {
    %c0_i32 = arith.constant 0 : i32
    %c0_i32_0 = arith.constant 0 : i32
    %c0_i32_1 = arith.constant 0 : i32
    return %c0_i32, %c0_i32_0 : i32, i32
  }
  func.func @transform_13(%arg0: i32) -> (i32, i32) {
    %c0_i32 = arith.constant 0 : i32
    %c0_i32_0 = arith.constant 0 : i32
    return %arg0, %c0_i32 : i32, i32
  }
}

</mosaic_0001>

<llo_original>
// kernel: _mlp_head_call.1
$region0: #{_mlp_head_call.1}
  #allocation0 [shape = 'u32[]', space=smem, size = 0x4, offset = 0x4, fixed_abs, tag = 'smem constant byte address 0x4 - core index']
  #allocation1 [shape = 'u32[144,128]{1,0:T(1,128)}', space=vmem, size = 0x12000, scoped, tag = 'internal scratch']
  %s0 = inlined_call_operand.vmem [shape: bf16[16,128], index: 0, kind: input, shape index: {}]
  %s1 = inlined_call_operand.vmem [shape: bf16[128,128], index: 1, kind: input, shape index: {}]
  %s2 = inlined_call_operand.vmem [shape: f32[1,128], index: 2, kind: input, shape index: {}]
  %s3 = inlined_call_operand.vmem [shape: f32[1,128], index: 3, kind: input, shape index: {}]
  %s4 = inlined_call_operand.vmem [shape: f32[1,128], index: 4, kind: input, shape index: {}]
  %s5 = inlined_call_operand.hbm [shape: bf16[128,128], index: 5, kind: input, shape index: {}]
  %s6 = inlined_call_operand.vmem [shape: f32[1,128], index: 6, kind: input, shape index: {}]
  %s7 = inlined_call_operand.vmem [shape: f32[1,128], index: 7, kind: input, shape index: {}]
  %s8 = inlined_call_operand.vmem [shape: f32[1,128], index: 8, kind: input, shape index: {}]
  %s9 = inlined_call_operand.hbm [shape: bf16[128,128], index: 9, kind: input, shape index: {}]
  %s10 = inlined_call_operand.vmem [shape: f32[1,128], index: 10, kind: input, shape index: {}]
  %s11 = inlined_call_operand.vmem [shape: f32[1,128], index: 11, kind: input, shape index: {}]
  %s12 = inlined_call_operand.vmem [shape: f32[1,128], index: 12, kind: input, shape index: {}]
  %s13 = inlined_call_operand.hbm [shape: f32[16,128], index: 13, kind: output, shape index: {}]
  %s14 = sld [smem:[#allocation0]]
  $region70: #{_mlp_head_call.1} parent=0
    _
  %s16 = ssub.s32 1, %s14
  %s17 = scalar_select 0, %s16, %s14
  $region1: #{_mlp_head_call.1} parent=0
    #allocation2 [shape = 'u8[32768]{0}', space=vmem, size = 0x8000, scoped, tag = 'input window, operand 5, single buffered']
    #allocation3 [shape = 's32[1]{0}', space=sflag, size = 0x4, scoped, tag = 'scoped memory for _mlp_head_call.1']
    #allocation4 [shape = 's32[1]{0}', space=sflag, size = 0x4, scoped, tag = 'scoped memory for _mlp_head_call.1']
    #allocation5 [shape = 'u8[32768]{0}', space=vmem, size = 0x8000, scoped, tag = 'input window, operand 9, single buffered']
    #allocation6 [shape = 's32[1]{0}', space=sflag, size = 0x4, scoped, tag = 'scoped memory for _mlp_head_call.1']
    #allocation7 [shape = 'u8[8192]{0}', space=vmem, size = 0x2000, scoped, tag = 'output window, operand 0, single buffered']
    %18 = vsyncpa [#allocation3], 0
    %19 = vsyncpa [#allocation6], 0
    %20 = vsyncpa [#allocation4], 0
    // Predicated region
    $region2: #{_mlp_head_call.1} parent=1 // pred_check
      _
    $region3: #{_mlp_head_call.1} parent=1 // pred_check_branch
      %22 = sbr.rel (0) target = $region5
    $region4: #{_mlp_head_call.1} parent=1 // pred_region
      _
    $region5: #{_mlp_head_call.1} parent=1 // pred_fallthru
      _
    // Predicated region
    $region6: #{_mlp_head_call.1} parent=1 // pred_check
      _
    $region7: #{_mlp_head_call.1} parent=1 // pred_check_branch
      %24 = sbr.rel (0) target = $region9
    $region8: #{_mlp_head_call.1} parent=1 // pred_region
      _
    $region9: #{_mlp_head_call.1} parent=1 // pred_fallthru
      _
    // Predicated region
    $region10: #{_mlp_head_call.1} parent=1 // pred_check
      _
    $region11: #{_mlp_head_call.1} parent=1 // pred_check_branch
      %26 = sbr.rel (0) target = $region13
    $region12: #{_mlp_head_call.1} parent=1 // pred_region
      _
    $region13: #{_mlp_head_call.1} parent=1 // pred_fallthru
      _
    // Predicated region
    $region14: #{_mlp_head_call.1} parent=1 // pred_check
      _
    $region15: #{_mlp_head_call.1} parent=1 // pred_check_branch
      %28 = sbr.rel (0) target = $region17
    $region16: #{_mlp_head_call.1} parent=1 // pred_region
      _
    $region17: #{_mlp_head_call.1} parent=1 // pred_fallthru
      _
    // Predicated region
    $region18: #{_mlp_head_call.1} parent=1 // pred_check
      _
    $region19: #{_mlp_head_call.1} parent=1 // pred_check_branch
      %30 = sbr.rel (0) target = $region21
    $region20: #{_mlp_head_call.1} parent=1 // pred_region
      _
    $region21: #{_mlp_head_call.1} parent=1 // pred_fallthru
      _
    // Predicated region
    $region22: #{_mlp_head_call.1} parent=1 // pred_check
      _
    $region23: #{_mlp_head_call.1} parent=1 // pred_check_branch
      %32 = sbr.rel (0) target = $region25
    $region24: #{_mlp_head_call.1} parent=1 // pred_region
      %s34 = ssub.s32 1024, 1024
      %35 = vsyncadd [#allocation3], %s34
      %s36 = sshll.u32 [#allocation2], 4
      %s37 = int_to_ptr.vmem [resolvable:$true] %s36
      %42 = dma.hbm_to_vmem [thread:$0]  %s5, 1024, %s37, [#allocation3], 64, 64, 4
    $region25: #{_mlp_head_call.1} parent=1 // pred_fallthru
      _
    // Predicated region
    $region26: #{_mlp_head_call.1} parent=1 // pred_check
      _
    $region27: #{_mlp_head_call.1} parent=1 // pred_check_branch
      %44 = sbr.rel (0) target = $region29
    $region28: #{_mlp_head_call.1} parent=1 // pred_region
      _
    $region29: #{_mlp_head_call.1} parent=1 // pred_fallthru
      _
    // Predicated region
    $region30: #{_mlp_head_call.1} parent=1 // pred_check
      _
    $region31: #{_mlp_head_call.1} parent=1 // pred_check_branch
      %46 = sbr.rel (0) target = $region33
    $region32: #{_mlp_head_call.1} parent=1 // pred_region
      _
    $region33: #{_mlp_head_call.1} parent=1 // pred_fallthru
      _
    // Predicated region
    $region34: #{_mlp_head_call.1} parent=1 // pred_check
      _
    $region35: #{_mlp_head_call.1} parent=1 // pred_check_branch
      %48 = sbr.rel (0) target = $region37
    $region36: #{_mlp_head_call.1} parent=1 // pred_region
      _
    $region37: #{_mlp_head_call.1} parent=1 // pred_fallthru
      _
    // Predicated region
    $region38: #{_mlp_head_call.1} parent=1 // pred_check
      _
    $region39: #{_mlp_head_call.1} parent=1 // pred_check_branch
      %50 = sbr.rel (0) target = $region41
    $region40: #{_mlp_head_call.1} parent=1 // pred_region
      %s52 = ssub.s32 1024, 1024
      %53 = vsyncadd [#allocation6], %s52
      %s54 = sshll.u32 [#allocation5], 4
      %s55 = int_to_ptr.vmem [resolvable:$true] %s54
      %60 = dma.hbm_to_vmem [thread:$0]  %s9, 1024, %s55, [#allocation6], 64, 64, 4
    $region41: #{_mlp_head_call.1} parent=1 // pred_fallthru
      _
    // Predicated region
    $region42: #{_mlp_head_call.1} parent=1 // pred_check
      _
    $region43: #{_mlp_head_call.1} parent=1 // pred_check_branch
      %62 = sbr.rel (0) target = $region45
    $region44: #{_mlp_head_call.1} parent=1 // pred_region
      _
    $region45: #{_mlp_head_call.1} parent=1 // pred_fallthru
      _
    // Predicated region
    $region46: #{_mlp_head_call.1} parent=1 // pred_check
      _
    $region47: #{_mlp_head_call.1} parent=1 // pred_check_branch
      %64 = sbr.rel (0) target = $region49
    $region48: #{_mlp_head_call.1} parent=1 // pred_region
      _
    $region49: #{_mlp_head_call.1} parent=1 // pred_fallthru
      _
    // Predicated region
    $region50: #{_mlp_head_call.1} parent=1 // pred_check
      _
    $region51: #{_mlp_head_call.1} parent=1 // pred_check_branch
      %66 = sbr.rel (0) target = $region53
    $region52: #{_mlp_head_call.1} parent=1 // pred_region
      _
    $region53: #{_mlp_head_call.1} parent=1 // pred_fallthru
      _
    // Predicated region
    $region54: #{_mlp_head_call.1} parent=1 // pred_check
      _
    $region55: #{_mlp_head_call.1} parent=1 // pred_check_branch
      %68 = sbr.rel (0) target = $region57
    $region56: #{_mlp_head_call.1} parent=1 // pred_region
      %69 = dma.done [#allocation3], 1024
    $region57: #{_mlp_head_call.1} parent=1 // pred_fallthru
      _
    // Predicated region
    $region58: #{_mlp_head_call.1} parent=1 // pred_check
      _
    $region59: #{_mlp_head_call.1} parent=1 // pred_check_branch
      %71 = sbr.rel (0) target = $region61
    $region60: #{_mlp_head_call.1} parent=1 // pred_region
      %72 = dma.done [#allocation6], 1024
    $region61: #{_mlp_head_call.1} parent=1 // pred_fallthru
      _
    %v74 = vld [vmem:[%s0] sm:$0xf]
    %v75 = vld [vmem:[%s0 + $0x4] sm:$0xf]
    %v76 = vld [vmem:[%s1] sm:$0xf]
    %v77 = vld [vmem:[%s1 + $0x4] sm:$0xf]
    %v78 = vld [vmem:[%s1 + $0x8] sm:$0xf]
    %v79 = vld [vmem:[%s1 + $0xc] sm:$0xf]
    %v80 = vld [vmem:[%s1 + $0x10] sm:$0xf]
    %v81 = vld [vmem:[%s1 + $0x14] sm:$0xf]
    %v82 = vld [vmem:[%s1 + $0x18] sm:$0xf]
    %v83 = vld [vmem:[%s1 + $0x1c] sm:$0xf]
    %v84 = vld [vmem:[%s1 + $0x20] sm:$0xf]
    %v85 = vld [vmem:[%s1 + $0x24] sm:$0xf]
    %v86 = vld [vmem:[%s1 + $0x28] sm:$0xf]
    %v87 = vld [vmem:[%s1 + $0x2c] sm:$0xf]
    %v88 = vld [vmem:[%s1 + $0x30] sm:$0xf]
    %v89 = vld [vmem:[%s1 + $0x34] sm:$0xf]
    %v90 = vld [vmem:[%s1 + $0x38] sm:$0xf]
    %v91 = vld [vmem:[%s1 + $0x3c] sm:$0xf]
    %v92 = vld [vmem:[%s2] sm:$0x1]
    %v94 = vlaneseq
    %v95 = vshrl.u32 %v94, 7
    %v96 = vsub.s32 0, %v95
    %v97 = vrot.slane %v92, %v96
    %v101 = vunpack.c.l.b16 %v74
    %v102 = vunpack.c.l.b16 %v75
    %v103 = vpack.c.b16 %v102, %v101
    %v121 = vunpack.c.l.b16 %v76
    %v122 = vunpack.c.l.b16 %v77
    %v123 = vunpack.c.l.b16 %v78
    %v124 = vunpack.c.l.b16 %v79
    %v125 = vunpack.c.l.b16 %v80
    %v126 = vunpack.c.l.b16 %v81
    %v127 = vunpack.c.l.b16 %v82
    %v128 = vunpack.c.l.b16 %v83
    %v129 = vunpack.c.l.b16 %v84
    %v130 = vunpack.c.l.b16 %v85
    %v131 = vunpack.c.l.b16 %v86
    %v132 = vunpack.c.l.b16 %v87
    %v133 = vunpack.c.l.b16 %v88
    %v134 = vunpack.c.l.b16 %v89
    %v135 = vunpack.c.l.b16 %v90
    %v136 = vunpack.c.l.b16 %v91
    %v137 = vpack.c.b16 %v122, %v121
    %v138 = vpack.c.b16 %v124, %v123
    %v139 = vpack.c.b16 %v126, %v125
    %v140 = vpack.c.b16 %v128, %v127
    %v141 = vpack.c.b16 %v130, %v129
    %v142 = vpack.c.b16 %v132, %v131
    %v143 = vpack.c.b16 %v134, %v133
    %v144 = vpack.c.b16 %v136, %v135
    %153 = vmatprep.subr.bf16.mxu0 0
    %154 = vmatpush1.bf16.msra.mxu0 %v137
    %155 = vmatprep.subr.bf16.mxu0 0
    %156 = vmatpush1.bf16.msra.mxu0 %v138
    %157 = vmatprep.subr.bf16.mxu0 0
    %158 = vmatpush1.bf16.msra.mxu0 %v139
    %159 = vmatprep.subr.bf16.mxu0 0
    %160 = vmatpush1.bf16.msra.mxu0 %v140
    %161 = vmatprep.subr.bf16.mxu0 0
    %162 = vmatpush1.bf16.msra.mxu0 %v141
    %163 = vmatprep.subr.bf16.mxu0 0
    %164 = vmatpush1.bf16.msra.mxu0 %v142
    %165 = vmatprep.subr.bf16.mxu0 0
    %166 = vmatpush1.bf16.msra.mxu0 %v143
    %167 = vmatprep.subr.bf16.mxu0 0
    %168 = vmatpush1.bf16.msra.mxu0 %v144
    %169 = vmatprep.subr.bf16.mxu0 0
    %170 = vmatpush1.bf16.msra.mxu0 0
    %171 = vmatprep.subr.bf16.mxu0 0
    %172 = vmatpush1.bf16.msra.mxu0 0
    %173 = vmatprep.subr.bf16.mxu0 0
    %174 = vmatpush1.bf16.msra.mxu0 0
    %175 = vmatprep.subr.bf16.mxu0 0
    %176 = vmatpush1.bf16.msra.mxu0 0
    %177 = vmatprep.subr.bf16.mxu0 0
    %178 = vmatpush1.bf16.msra.mxu0 0
    %179 = vmatprep.subr.bf16.mxu0 0
    %180 = vmatpush1.bf16.msra.mxu0 0
    %181 = vmatprep.subr.bf16.mxu0 0
    %182 = vmatpush1.bf16.msra.mxu0 0
    %183 = vmatprep.subr.bf16.mxu0 0
    %184 = vmatpush1.bf16.msra.mxu0 0
    %185 = vmatprep.mubr.bf16.mxu0 0
    %186 = vmatmul.mubr.bf16.gmra.mrb[0].mxu0 %v103
    %v187 = vpop.f32.mrb[0].mxu0
    %v188 = vadd.f32 %v97, %v187
    %v189 = vpop.f32.mrb[0].mxu0
    %v190 = vpop.f32.mrb[0].mxu0
    %v191 = vadd.f32 %v97, %v190
    %v192 = vpop.f32.mrb[0].mxu0
    %193 = vdwg.mxu0
    %v194 = vld [vmem:[%s3] sm:$0x1]
    %v195 = vld [vmem:[%s4] sm:$0x1]
    %196 = vadd.xlane.f32.xlu0 %v188
    %v197 = vpop.xlane.xlu0 %196
    %198 = vadd.xlane.f32.xlu0 %v191
    %v199 = vpop.xlane.xlu0 %198
    %v200 = vmul.f32 %v197, 0.015625
    %v201 = vmul.f32 %v199, 0.015625
    %v202 = vmul.f32 %v188, %v188
    %v203 = vmul.f32 %v191, %v191
    %204 = vadd.xlane.f32.xlu0 %v202
    %v205 = vpop.xlane.xlu0 %204
    %206 = vadd.xlane.f32.xlu0 %v203
    %v207 = vpop.xlane.xlu0 %206
    %v208 = vmul.f32 %v205, 0.015625
    %v209 = vmul.f32 %v207, 0.015625
    %v210 = vmul.f32 %v200, %v200
    %v211 = vmul.f32 %v201, %v201
    %v212 = vsub.f32 %v208, %v210
    %v213 = vsub.f32 %v209, %v211
    %v214 = vmax.f32 %v212, 0.0
    %v215 = vmax.f32 %v213, 0.0
    %v216 = vadd.f32 %v214, 1e-05
    %v217 = vadd.f32 %v215, 1e-05
    %v218 = vrsqrt.pop %v216
    %v219 = vrsqrt.pop %v217
    %v221 = vlaneseq
    %v222 = vshrl.u32 %v221, 7
    %v223 = vsub.s32 0, %v222
    %v224 = vrot.slane %v194, %v223
    %v226 = vmul.f32 %v224, %v218
    %v227 = vmul.f32 %v224, %v219
    %v228 = vmul.f32 %v200, %v226
    %v229 = vmul.f32 %v201, %v227
    %v231 = vlaneseq
    %v232 = vshrl.u32 %v231, 7
    %v233 = vsub.s32 0, %v232
    %v234 = vrot.slane %v195, %v233
    %v236 = vsub.f32 %v234, %v228
    %v237 = vsub.f32 %v234, %v229
    %v238 = vmul.f32 %v188, %v226
    %v239 = vmul.f32 %v191, %v227
    %v240 = vadd.f32 %v238, %v236
    %v241 = vadd.f32 %v239, %v237
    %v242 = vmax.f32 %v240, 0.0
    %v243 = vmax.f32 %v241, 0.0
    %v244 = vpack.c.bf16 %v243, %v242
    %v245 = vld [vmem:[#allocation2] sm:$0xf]
    %v246 = vld [vmem:[#allocation2 + $0x4] sm:$0xf]
    %v247 = vld [vmem:[#allocation2 + $0x8] sm:$0xf]
    %v248 = vld [vmem:[#allocation2 + $0xc] sm:$0xf]
    %v249 = vld [vmem:[#allocation2 + $0x10] sm:$0xf]
    %v250 = vld [vmem:[#allocation2 + $0x14] sm:$0xf]
    %v251 = vld [vmem:[#allocation2 + $0x18] sm:$0xf]
    %v252 = vld [vmem:[#allocation2 + $0x1c] sm:$0xf]
    %v253 = vld [vmem:[#allocation2 + $0x20] sm:$0xf]
    %v254 = vld [vmem:[#allocation2 + $0x24] sm:$0xf]
    %v255 = vld [vmem:[#allocation2 + $0x28] sm:$0xf]
    %v256 = vld [vmem:[#allocation2 + $0x2c] sm:$0xf]
    %v257 = vld [vmem:[#allocation2 + $0x30] sm:$0xf]
    %v258 = vld [vmem:[#allocation2 + $0x34] sm:$0xf]
    %v259 = vld [vmem:[#allocation2 + $0x38] sm:$0xf]
    %v260 = vld [vmem:[#allocation2 + $0x3c] sm:$0xf]
    %v261 = vld [vmem:[%s6] sm:$0x1]
    %v263 = vlaneseq
    %v264 = vshrl.u32 %v263, 7
    %v265 = vsub.s32 0, %v264
    %v266 = vrot.slane %v261, %v265
    %v284 = vunpack.c.l.b16 %v245
    %v285 = vunpack.c.l.b16 %v246
    %v286 = vunpack.c.l.b16 %v247
    %v287 = vunpack.c.l.b16 %v248
    %v288 = vunpack.c.l.b16 %v249
    %v289 = vunpack.c.l.b16 %v250
    %v290 = vunpack.c.l.b16 %v251
    %v291 = vunpack.c.l.b16 %v252
    %v292 = vunpack.c.l.b16 %v253
    %v293 = vunpack.c.l.b16 %v254
    %v294 = vunpack.c.l.b16 %v255
    %v295 = vunpack.c.l.b16 %v256
    %v296 = vunpack.c.l.b16 %v257
    %v297 = vunpack.c.l.b16 %v258
    %v298 = vunpack.c.l.b16 %v259
    %v299 = vunpack.c.l.b16 %v260
    %v300 = vpack.c.b16 %v285, %v284
    %v301 = vpack.c.b16 %v287, %v286
    %v302 = vpack.c.b16 %v289, %v288
    %v303 = vpack.c.b16 %v291, %v290
    %v304 = vpack.c.b16 %v293, %v292
    %v305 = vpack.c.b16 %v295, %v294
    %v306 = vpack.c.b16 %v297, %v296
    %v307 = vpack.c.b16 %v299, %v298
    %316 = vmatprep.subr.bf16.mxu0 0
    %317 = vmatpush1.bf16.msra.mxu0 %v300
    %318 = vmatprep.subr.bf16.mxu0 0
    %319 = vmatpush1.bf16.msra.mxu0 %v301
    %320 = vmatprep.subr.bf16.mxu0 0
    %321 = vmatpush1.bf16.msra.mxu0 %v302
    %322 = vmatprep.subr.bf16.mxu0 0
    %323 = vmatpush1.bf16.msra.mxu0 %v303
    %324 = vmatprep.subr.bf16.mxu0 0
    %325 = vmatpush1.bf16.msra.mxu0 %v304
    %326 = vmatprep.subr.bf16.mxu0 0
    %327 = vmatpush1.bf16.msra.mxu0 %v305
    %328 = vmatprep.subr.bf16.mxu0 0
    %329 = vmatpush1.bf16.msra.mxu0 %v306
    %330 = vmatprep.subr.bf16.mxu0 0
    %331 = vmatpush1.bf16.msra.mxu0 %v307
    %332 = vmatprep.subr.bf16.mxu0 0
    %333 = vmatpush1.bf16.msra.mxu0 0
    %334 = vmatprep.subr.bf16.mxu0 0
    %335 = vmatpush1.bf16.msra.mxu0 0
    %336 = vmatprep.subr.bf16.mxu0 0
    %337 = vmatpush1.bf16.msra.mxu0 0
    %338 = vmatprep.subr.bf16.mxu0 0
    %339 = vmatpush1.bf16.msra.mxu0 0
    %340 = vmatprep.subr.bf16.mxu0 0
    %341 = vmatpush1.bf16.msra.mxu0 0
    %342 = vmatprep.subr.bf16.mxu0 0
    %343 = vmatpush1.bf16.msra.mxu0 0
    %344 = vmatprep.subr.bf16.mxu0 0
    %345 = vmatpush1.bf16.msra.mxu0 0
    %346 = vmatprep.subr.bf16.mxu0 0
    %347 = vmatpush1.bf16.msra.mxu0 0
    %348 = vmatprep.mubr.bf16.mxu0 0
    %349 = vmatmul.mubr.bf16.gmra.mrb[0].mxu0 %v244
    %v350 = vpop.f32.mrb[0].mxu0
    %v351 = vadd.f32 %v266, %v350
    %v352 = vpop.f32.mrb[0].mxu0
    %v353 = vpop.f32.mrb[0].mxu0
    %v354 = vadd.f32 %v266, %v353
    %v355 = vpop.f32.mrb[0].mxu0
    %356 = vdwg.mxu0
    %v357 = vld [vmem:[%s7] sm:$0x1]
    %v358 = vld [vmem:[%s8] sm:$0x1]
    %359 = vadd.xlane.f32.xlu0 %v351
    %v360 = vpop.xlane.xlu0 %359
    %361 = vadd.xlane.f32.xlu0 %v354
    %v362 = vpop.xlane.xlu0 %361
    %v363 = vmul.f32 %v360, 0.015625
    %v364 = vmul.f32 %v362, 0.015625
    %v365 = vmul.f32 %v351, %v351
    %v366 = vmul.f32 %v354, %v354
    %367 = vadd.xlane.f32.xlu0 %v365
    %v368 = vpop.xlane.xlu0 %367
    %369 = vadd.xlane.f32.xlu0 %v366
    %v370 = vpop.xlane.xlu0 %369
    %v371 = vmul.f32 %v368, 0.015625
    %v372 = vmul.f32 %v370, 0.015625
    %v373 = vmul.f32 %v363, %v363
    %v374 = vmul.f32 %v364, %v364
    %v375 = vsub.f32 %v371, %v373
    %v376 = vsub.f32 %v372, %v374
    %v377 = vmax.f32 %v375, 0.0
    %v378 = vmax.f32 %v376, 0.0
    %v379 = vadd.f32 %v377, 1e-05
    %v380 = vadd.f32 %v378, 1e-05
    %v381 = vrsqrt.pop %v379
    %v382 = vrsqrt.pop %v380
    %v384 = vlaneseq
    %v385 = vshrl.u32 %v384, 7
    %v386 = vsub.s32 0, %v385
    %v387 = vrot.slane %v357, %v386
    %v389 = vmul.f32 %v387, %v381
    %v390 = vmul.f32 %v387, %v382
    %v391 = vmul.f32 %v363, %v389
    %v392 = vmul.f32 %v364, %v390
    %v394 = vlaneseq
    %v395 = vshrl.u32 %v394, 7
    %v396 = vsub.s32 0, %v395
    %v397 = vrot.slane %v358, %v396
    %v399 = vsub.f32 %v397, %v391
    %v400 = vsub.f32 %v397, %v392
    %v401 = vmul.f32 %v351, %v389
    %v402 = vmul.f32 %v354, %v390
    %v403 = vadd.f32 %v401, %v399
    %v404 = vadd.f32 %v402, %v400
    %v405 = vmax.f32 %v403, 0.0
    %v406 = vmax.f32 %v404, 0.0
    %v407 = vpack.c.bf16 %v406, %v405
    %v408 = vld [vmem:[#allocation5] sm:$0xf]
    %v409 = vld [vmem:[#allocation5 + $0x4] sm:$0xf]
    %v410 = vld [vmem:[#allocation5 + $0x8] sm:$0xf]
    %v411 = vld [vmem:[#allocation5 + $0xc] sm:$0xf]
    %v412 = vld [vmem:[#allocation5 + $0x10] sm:$0xf]
    %v413 = vld [vmem:[#allocation5 + $0x14] sm:$0xf]
    %v414 = vld [vmem:[#allocation5 + $0x18] sm:$0xf]
    %v415 = vld [vmem:[#allocation5 + $0x1c] sm:$0xf]
    %v416 = vld [vmem:[#allocation5 + $0x20] sm:$0xf]
    %v417 = vld [vmem:[#allocation5 + $0x24] sm:$0xf]
    %v418 = vld [vmem:[#allocation5 + $0x28] sm:$0xf]
    %v419 = vld [vmem:[#allocation5 + $0x2c] sm:$0xf]
    %v420 = vld [vmem:[#allocation5 + $0x30] sm:$0xf]
    %v421 = vld [vmem:[#allocation5 + $0x34] sm:$0xf]
    %v422 = vld [vmem:[#allocation5 + $0x38] sm:$0xf]
    %v423 = vld [vmem:[#allocation5 + $0x3c] sm:$0xf]
    %v424 = vld [vmem:[%s10] sm:$0x1]
    %v426 = vlaneseq
    %v427 = vshrl.u32 %v426, 7
    %v428 = vsub.s32 0, %v427
    %v429 = vrot.slane %v424, %v428
    %v447 = vunpack.c.l.b16 %v408
    %v448 = vunpack.c.l.b16 %v409
    %v449 = vunpack.c.l.b16 %v410
    %v450 = vunpack.c.l.b16 %v411
    %v451 = vunpack.c.l.b16 %v412
    %v452 = vunpack.c.l.b16 %v413
    %v453 = vunpack.c.l.b16 %v414
    %v454 = vunpack.c.l.b16 %v415
    %v455 = vunpack.c.l.b16 %v416
    %v456 = vunpack.c.l.b16 %v417
    %v457 = vunpack.c.l.b16 %v418
    %v458 = vunpack.c.l.b16 %v419
    %v459 = vunpack.c.l.b16 %v420
    %v460 = vunpack.c.l.b16 %v421
    %v461 = vunpack.c.l.b16 %v422
    %v462 = vunpack.c.l.b16 %v423
    %v463 = vpack.c.b16 %v448, %v447
    %v464 = vpack.c.b16 %v450, %v449
    %v465 = vpack.c.b16 %v452, %v451
    %v466 = vpack.c.b16 %v454, %v453
    %v467 = vpack.c.b16 %v456, %v455
    %v468 = vpack.c.b16 %v458, %v457
    %v469 = vpack.c.b16 %v460, %v459
    %v470 = vpack.c.b16 %v462, %v461
    %479 = vmatprep.subr.bf16.mxu0 0
    %480 = vmatpush1.bf16.msra.mxu0 %v463
    %481 = vmatprep.subr.bf16.mxu0 0
    %482 = vmatpush1.bf16.msra.mxu0 %v464
    %483 = vmatprep.subr.bf16.mxu0 0
    %484 = vmatpush1.bf16.msra.mxu0 %v465
    %485 = vmatprep.subr.bf16.mxu0 0
    %486 = vmatpush1.bf16.msra.mxu0 %v466
    %487 = vmatprep.subr.bf16.mxu0 0
    %488 = vmatpush1.bf16.msra.mxu0 %v467
    %489 = vmatprep.subr.bf16.mxu0 0
    %490 = vmatpush1.bf16.msra.mxu0 %v468
    %491 = vmatprep.subr.bf16.mxu0 0
    %492 = vmatpush1.bf16.msra.mxu0 %v469
    %493 = vmatprep.subr.bf16.mxu0 0
    %494 = vmatpush1.bf16.msra.mxu0 %v470
    %495 = vmatprep.subr.bf16.mxu0 0
    %496 = vmatpush1.bf16.msra.mxu0 0
    %497 = vmatprep.subr.bf16.mxu0 0
    %498 = vmatpush1.bf16.msra.mxu0 0
    %499 = vmatprep.subr.bf16.mxu0 0
    %500 = vmatpush1.bf16.msra.mxu0 0
    %501 = vmatprep.subr.bf16.mxu0 0
    %502 = vmatpush1.bf16.msra.mxu0 0
    %503 = vmatprep.subr.bf16.mxu0 0
    %504 = vmatpush1.bf16.msra.mxu0 0
    %505 = vmatprep.subr.bf16.mxu0 0
    %506 = vmatpush1.bf16.msra.mxu0 0
    %507 = vmatprep.subr.bf16.mxu0 0
    %508 = vmatpush1.bf16.msra.mxu0 0
    %509 = vmatprep.subr.bf16.mxu0 0
    %510 = vmatpush1.bf16.msra.mxu0 0
    %511 = vmatprep.mubr.bf16.mxu0 0
    %512 = vmatmul.mubr.bf16.gmra.mrb[0].mxu0 %v407
    %v513 = vpop.f32.mrb[0].mxu0
    %v514 = vadd.f32 %v429, %v513
    %v515 = vpop.f32.mrb[0].mxu0
    %v516 = vpop.f32.mrb[0].mxu0
    %v517 = vadd.f32 %v429, %v516
    %v518 = vpop.f32.mrb[0].mxu0
    %519 = vdwg.mxu0
    %v520 = vld [vmem:[%s11] sm:$0x1]
    %v521 = vld [vmem:[%s12] sm:$0x1]
    %522 = vadd.xlane.f32.xlu0 %v514
    %v523 = vpop.xlane.xlu0 %522
    %524 = vadd.xlane.f32.xlu0 %v517
    %v525 = vpop.xlane.xlu0 %524
    %v526 = vmul.f32 %v523, 0.041666668
    %v527 = vmul.f32 %v525, 0.041666668
    %v528 = vmul.f32 %v514, %v514
    %v529 = vmul.f32 %v517, %v517
    %530 = vadd.xlane.f32.xlu0 %v528
    %v531 = vpop.xlane.xlu0 %530
    %532 = vadd.xlane.f32.xlu0 %v529
    %v533 = vpop.xlane.xlu0 %532
    %v534 = vmul.f32 %v531, 0.041666668
    %v535 = vmul.f32 %v533, 0.041666668
    %v536 = vmul.f32 %v526, %v526
    %v537 = vmul.f32 %v527, %v527
    %v538 = vsub.f32 %v534, %v536
    %v539 = vsub.f32 %v535, %v537
    %v540 = vmax.f32 %v538, 0.0
    %v541 = vmax.f32 %v539, 0.0
    %v542 = vadd.f32 %v540, 1e-05
    %v543 = vadd.f32 %v541, 1e-05
    %v544 = vrsqrt.pop %v542
    %v545 = vrsqrt.pop %v543
    %v547 = vlaneseq
    %v548 = vshrl.u32 %v547, 7
    %v549 = vsub.s32 0, %v548
    %v550 = vrot.slane %v520, %v549
    %v552 = vmul.f32 %v550, %v544
    %v553 = vmul.f32 %v550, %v545
    %v554 = vmul.f32 %v526, %v552
    %v555 = vmul.f32 %v527, %v553
    %v557 = vlaneseq
    %v558 = vshrl.u32 %v557, 7
    %v559 = vsub.s32 0, %v558
    %v560 = vrot.slane %v521, %v559
    %v562 = vsub.f32 %v560, %v554
    %v563 = vsub.f32 %v560, %v555
    %v564 = vmul.f32 %v514, %v552
    %v565 = vmul.f32 %v517, %v553
    %v566 = vadd.f32 %v564, %v562
    %v567 = vadd.f32 %v565, %v563
    %568 = vst [vmem:[#allocation7] sm:$0xff] %v566
    %569 = vst [vmem:[#allocation7 + $0x8] sm:$0xff] %v567
    // Predicated region
    $region62: #{_mlp_head_call.1} parent=1 // pred_check
      _
    $region63: #{_mlp_head_call.1} parent=1 // pred_check_branch
      %571 = sbr.rel (0) target = $region65
    $region64: #{_mlp_head_call.1} parent=1 // pred_region
      %s573 = ssub.s32 256, 256
      %574 = vsyncadd [#allocation4], %s573
      %s575 = sshll.u32 [#allocation7], 4
      %s576 = int_to_ptr.vmem [resolvable:$true] %s575
      %581 = dma.vmem_to_hbm [thread:$0]  %s576, 256, %s13, [#allocation4], 128, 128, 8
    $region65: #{_mlp_head_call.1} parent=1 // pred_fallthru
      _
    // Predicated region
    $region66: #{_mlp_head_call.1} parent=1 // pred_check
      _
    $region67: #{_mlp_head_call.1} parent=1 // pred_check_branch
      %583 = sbr.rel (0) target = $region69
    $region68: #{_mlp_head_call.1} parent=1 // pred_region
      %584 = dma.done [#allocation4], 256
    $region69: #{_mlp_head_call.1} parent=1 // pred_fallthru
      _
    %585 = vsyncpa [#allocation3], 1
    %586 = vsyncpa [#allocation6], 1
    %587 = vsyncpa [#allocation4], 1

// kernel: _mlp_head_call.1
$region0: #{_mlp_head_call.1}
  #allocation0 [shape = 'u32[]', space=smem, size = 0x4, offset = 0x4, fixed_abs, tag = 'smem constant byte address 0x4 - core index']
  #allocation1 [shape = 'u32[144,128]{1,0:T(1,128)}', space=vmem, size = 0x12000, scoped, tag = 'internal scratch']
  %s0 = inlined_call_operand.vmem [shape: bf16[16,128], index: 0, kind: input, shape index: {}]
  %s1 = inlined_call_operand.vmem [shape: bf16[128,128], index: 1, kind: input, shape index: {}]
  %s2 = inlined_call_operand.vmem [shape: f32[1,128], index: 2, kind: input, shape index: {}]
  %s3 = inlined_call_operand.vmem [shape: f32[1,128], index: 3, kind: input, shape index: {}]
  %s4 = inlined_call_operand.vmem [shape: f32[1,128], index: 4, kind: input, shape index: {}]
  %s5 = inlined_call_operand.hbm [shape: bf16[128,128], index: 5, kind: input, shape index: {}]
  %s6 = inlined_call_operand.vmem [shape: f32[1,128], index: 6, kind: input, shape index: {}]
  %s7 = inlined_call_operand.vmem [shape: f32[1,128], index: 7, kind: input, shape index: {}]
  %s8 = inlined_call_operand.vmem [shape: f32[1,128], index: 8, kind: input, shape index: {}]
  %s9 = inlined_call_operand.hbm [shape: bf16[128,128], index: 9, kind: input, shape index: {}]
  %s10 = inlined_call_operand.vmem [shape: f32[1,128], index: 10, kind: input, shape index: {}]
  %s11 = inlined_call_operand.vmem [shape: f32[1,128], index: 11, kind: input, shape index: {}]
  %s12 = inlined_call_operand.vmem [shape: f32[1,128], index: 12, kind: input, shape index: {}]
  %s13 = inlined_call_operand.hbm [shape: f32[16,128], index: 13, kind: output, shape index: {}]
  %s14 = sld [smem:[#allocation0]]
  $region70: #{_mlp_head_call.1} parent=0
    _
  %s16 = ssub.s32 1, %s14
  %s17 = scalar_select 0, %s16, %s14
  $region1: #{_mlp_head_call.1} parent=0
    #allocation2 [shape = 'u8[32768]{0}', space=vmem, size = 0x8000, scoped, tag = 'input window, operand 5, single buffered']
    #allocation3 [shape = 's32[1]{0}', space=sflag, size = 0x4, scoped, tag = 'scoped memory for _mlp_head_call.1']
    #allocation4 [shape = 's32[1]{0}', space=sflag, size = 0x4, scoped, tag = 'scoped memory for _mlp_head_call.1']
    #allocation5 [shape = 'u8[32768]{0}', space=vmem, size = 0x8000, scoped, tag = 'input window, operand 9, single buffered']
    #allocation6 [shape = 's32[1]{0}', space=sflag, size = 0x4, scoped, tag = 'scoped memory for _mlp_head_call.1']
    #allocation7 [shape = 'u8[8192]{0}', space=vmem, size = 0x2000, scoped, tag = 'output window, operand 0, single buffered']
    %18 = vsyncpa [#allocation3], 0
    %19 = vsyncpa [#allocation6], 0
    %20 = vsyncpa [#allocation4], 0
    // Predicated region
    $region2: #{_mlp_head_call.1} parent=1 // pred_check
      _
    $region3: #{_mlp_head_call.1} parent=1 // pred_check_branch
      %22 = sbr.rel (0) target = $region5
    $region4: #{_mlp_head_call.1} parent=1 // pred_region
      _
    $region5: #{_mlp_head_call.1} parent=1 // pred_fallthru
      _
    // Predicated region
    $region6: #{_mlp_head_call.1} parent=1 // pred_check
      _
    $region7: #{_mlp_head_call.1} parent=1 // pred_check_branch
      %24 = sbr.rel (0) target = $region9
    $region8: #{_mlp_head_call.1} parent=1 // pred_region
      _
    $region9: #{_mlp_head_call.1} parent=1 // pred_fallthru
      _
    // Predicated region
    $region10: #{_mlp_head_call.1} parent=1 // pred_check
      _
    $region11: #{_mlp_head_call.1} parent=1 // pred_check_branch
      %26 = sbr.rel (0) target = $region13
    $region12: #{_mlp_head_call.1} parent=1 // pred_region
      _
    $region13: #{_mlp_head_call.1} parent=1 // pred_fallthru
      _
    // Predicated region
    $region14: #{_mlp_head_call.1} parent=1 // pred_check
      _
    $region15: #{_mlp_head_call.1} parent=1 // pred_check_branch
      %28 = sbr.rel (0) target = $region17
    $region16: #{_mlp_head_call.1} parent=1 // pred_region
      _
    $region17: #{_mlp_head_call.1} parent=1 // pred_fallthru
      _
    // Predicated region
    $region18: #{_mlp_head_call.1} parent=1 // pred_check
      _
    $region19: #{_mlp_head_call.1} parent=1 // pred_check_branch
      %30 = sbr.rel (0) target = $region21
    $region20: #{_mlp_head_call.1} parent=1 // pred_region
      _
    $region21: #{_mlp_head_call.1} parent=1 // pred_fallthru
      _
    // Predicated region
    $region22: #{_mlp_head_call.1} parent=1 // pred_check
      _
    $region23: #{_mlp_head_call.1} parent=1 // pred_check_branch
      %32 = sbr.rel (0) target = $region25
    $region24: #{_mlp_head_call.1} parent=1 // pred_region
      %s34 = ssub.s32 1024, 1024
      %35 = vsyncadd [#allocation3], %s34
      %s36 = sshll.u32 [#allocation2], 4
      %s37 = int_to_ptr.vmem [resolvable:$true] %s36
      %42 = dma.hbm_to_vmem [thread:$0]  %s5, 1024, %s37, [#allocation3], 64, 64, 4
    $region25: #{_mlp_head_call.1} parent=1 // pred_fallthru
      _
    // Predicated region
    $region26: #{_mlp_head_call.1} parent=1 // pred_check
      _
    $region27: #{_mlp_head_call.1} parent=1 // pred_check_branch
      %44 = sbr.rel (0) target = $region29
    $region28: #{_mlp_head_call.1} parent=1 // pred_region
      _
    $region29: #{_mlp_head_call.1} parent=1 // pred_fallthru
      _
    // Predicated region
    $region30: #{_mlp_head_call.1} parent=1 // pred_check
      _
    $region31: #{_mlp_head_call.1} parent=1 // pred_check_branch
      %46 = sbr.rel (0) target = $region33
    $region32: #{_mlp_head_call.1} parent=1 // pred_region
      _
    $region33: #{_mlp_head_call.1} parent=1 // pred_fallthru
      _
    // Predicated region
    $region34: #{_mlp_head_call.1} parent=1 // pred_check
      _
    $region35: #{_mlp_head_call.1} parent=1 // pred_check_branch
      %48 = sbr.rel (0) target = $region37
    $region36: #{_mlp_head_call.1} parent=1 // pred_region
      _
    $region37: #{_mlp_head_call.1} parent=1 // pred_fallthru
      _
    // Predicated region
    $region38: #{_mlp_head_call.1} parent=1 // pred_check
      _
    $region39: #{_mlp_head_call.1} parent=1 // pred_check_branch
      %50 = sbr.rel (0) target = $region41
    $region40: #{_mlp_head_call.1} parent=1 // pred_region
      %s52 = ssub.s32 1024, 1024
      %53 = vsyncadd [#allocation6], %s52
      %s54 = sshll.u32 [#allocation5], 4
      %s55 = int_to_ptr.vmem [resolvable:$true] %s54
      %60 = dma.hbm_to_vmem [thread:$0]  %s9, 1024, %s55, [#allocation6], 64, 64, 4
    $region41: #{_mlp_head_call.1} parent=1 // pred_fallthru
      _
    // Predicated region
    $region42: #{_mlp_head_call.1} parent=1 // pred_check
      _
    $region43: #{_mlp_head_call.1} parent=1 // pred_check_branch
      %62 = sbr.rel (0) target = $region45
    $region44: #{_mlp_head_call.1} parent=1 // pred_region
      _
    $region45: #{_mlp_head_call.1} parent=1 // pred_fallthru
      _
    // Predicated region
    $region46: #{_mlp_head_call.1} parent=1 // pred_check
      _
    $region47: #{_mlp_head_call.1} parent=1 // pred_check_branch
      %64 = sbr.rel (0) target = $region49
    $region48: #{_mlp_head_call.1} parent=1 // pred_region
      _
    $region49: #{_mlp_head_call.1} parent=1 // pred_fallthru
      _
    // Predicated region
    $region50: #{_mlp_head_call.1} parent=1 // pred_check
      _
    $region51: #{_mlp_head_call.1} parent=1 // pred_check_branch
      %66 = sbr.rel (0) target = $region53
    $region52: #{_mlp_head_call.1} parent=1 // pred_region
      _
    $region53: #{_mlp_head_call.1} parent=1 // pred_fallthru
      _
    // Predicated region
    $region54: #{_mlp_head_call.1} parent=1 // pred_check
      _
    $region55: #{_mlp_head_call.1} parent=1 // pred_check_branch
      %68 = sbr.rel (0) target = $region57
    $region56: #{_mlp_head_call.1} parent=1 // pred_region
      %69 = dma.done [#allocation3], 1024
    $region57: #{_mlp_head_call.1} parent=1 // pred_fallthru
      _
    // Predicated region
    $region58: #{_mlp_head_call.1} parent=1 // pred_check
      _
    $region59: #{_mlp_head_call.1} parent=1 // pred_check_branch
      %71 = sbr.rel (0) target = $region61
    $region60: #{_mlp_head_call.1} parent=1 // pred_region
      %72 = dma.done [#allocation6], 1024
    $region61: #{_mlp_head_call.1} parent=1 // pred_fallthru
      _
    %v74 = vld [vmem:[%s0] sm:$0xf]
    %v75 = vld [vmem:[%s0 + $0x4] sm:$0xf]
    %v76 = vld [vmem:[%s1] sm:$0xf]
    %v77 = vld [vmem:[%s1 + $0x4] sm:$0xf]
    %v78 = vld [vmem:[%s1 + $0x8] sm:$0xf]
    %v79 = vld [vmem:[%s1 + $0xc] sm:$0xf]
    %v80 = vld [vmem:[%s1 + $0x10] sm:$0xf]
    %v81 = vld [vmem:[%s1 + $0x14] sm:$0xf]
    %v82 = vld [vmem:[%s1 + $0x18] sm:$0xf]
    %v83 = vld [vmem:[%s1 + $0x1c] sm:$0xf]
    %v84 = vld [vmem:[%s1 + $0x20] sm:$0xf]
    %v85 = vld [vmem:[%s1 + $0x24] sm:$0xf]
    %v86 = vld [vmem:[%s1 + $0x28] sm:$0xf]
    %v87 = vld [vmem:[%s1 + $0x2c] sm:$0xf]
    %v88 = vld [vmem:[%s1 + $0x30] sm:$0xf]
    %v89 = vld [vmem:[%s1 + $0x34] sm:$0xf]
    %v90 = vld [vmem:[%s1 + $0x38] sm:$0xf]
    %v91 = vld [vmem:[%s1 + $0x3c] sm:$0xf]
    %v92 = vld [vmem:[%s2] sm:$0x1]
    %v94 = vlaneseq
    %v95 = vshrl.u32 %v94, 7
    %v96 = vsub.s32 0, %v95
    %v97 = vrot.slane %v92, %v96
    %v101 = vunpack.c.l.b16 %v74
    %v102 = vunpack.c.l.b16 %v75
    %v103 = vpack.c.b16 %v102, %v101
    %v121 = vunpack.c.l.b16 %v76
    %v122 = vunpack.c.l.b16 %v77
    %v123 = vunpack.c.l.b16 %v78
    %v124 = vunpack.c.l.b16 %v79
    %v125 = vunpack.c.l.b16 %v80
    %v126 = vunpack.c.l.b16 %v81
    %v127 = vunpack.c.l.b16 %v82
    %v128 = vunpack.c.l.b16 %v83
    %v129 = vunpack.c.l.b16 %v84
    %v130 = vunpack.c.l.b16 %v85
    %v131 = vunpack.c.l.b16 %v86
    %v132 = vunpack.c.l.b16 %v87
    %v133 = vunpack.c.l.b16 %v88
    %v134 = vunpack.c.l.b16 %v89
    %v135 = vunpack.c.l.b16 %v90
    %v136 = vunpack.c.l.b16 %v91
    %v137 = vpack.c.b16 %v122, %v121
    %v138 = vpack.c.b16 %v124, %v123
    %v139 = vpack.c.b16 %v126, %v125
    %v140 = vpack.c.b16 %v128, %v127
    %v141 = vpack.c.b16 %v130, %v129
    %v142 = vpack.c.b16 %v132, %v131
    %v143 = vpack.c.b16 %v134, %v133
    %v144 = vpack.c.b16 %v136, %v135
    %153 = vmatprep.subr.bf16.mxu0 0
    %154 = vmatpush1.bf16.msra.mxu0 %v137
    %155 = vmatprep.subr.bf16.mxu0 0
    %156 = vmatpush1.bf16.msra.mxu0 %v138
    %157 = vmatprep.subr.bf16.mxu0 0
    %158 = vmatpush1.bf16.msra.mxu0 %v139
    %159 = vmatprep.subr.bf16.mxu0 0
    %160 = vmatpush1.bf16.msra.mxu0 %v140
    %161 = vmatprep.subr.bf16.mxu0 0
    %162 = vmatpush1.bf16.msra.mxu0 %v141
    %163 = vmatprep.subr.bf16.mxu0 0
    %164 = vmatpush1.bf16.msra.mxu0 %v142
    %165 = vmatprep.subr.bf16.mxu0 0
    %166 = vmatpush1.bf16.msra.mxu0 %v143
    %167 = vmatprep.subr.bf16.mxu0 0
    %168 = vmatpush1.bf16.msra.mxu0 %v144
    %169 = vmatprep.subr.bf16.mxu0 0
    %170 = vmatpush1.bf16.msra.mxu0 0
    %171 = vmatprep.subr.bf16.mxu0 0
    %172 = vmatpush1.bf16.msra.mxu0 0
    %173 = vmatprep.subr.bf16.mxu0 0
    %174 = vmatpush1.bf16.msra.mxu0 0
    %175 = vmatprep.subr.bf16.mxu0 0
    %176 = vmatpush1.bf16.msra.mxu0 0
    %177 = vmatprep.subr.bf16.mxu0 0
    %178 = vmatpush1.bf16.msra.mxu0 0
    %179 = vmatprep.subr.bf16.mxu0 0
    %180 = vmatpush1.bf16.msra.mxu0 0
    %181 = vmatprep.subr.bf16.mxu0 0
    %182 = vmatpush1.bf16.msra.mxu0 0
    %183 = vmatprep.subr.bf16.mxu0 0
    %184 = vmatpush1.bf16.msra.mxu0 0
    %185 = vmatprep.mubr.bf16.mxu0 0
    %186 = vmatmul.mubr.bf16.gmra.mrb[0].mxu0 %v103
    %v187 = vpop.f32.mrb[0].mxu0
    %v188 = vadd.f32 %v97, %v187
    %v189 = vpop.f32.mrb[0].mxu0
    %v190 = vpop.f32.mrb[0].mxu0
    %v191 = vadd.f32 %v97, %v190
    %v192 = vpop.f32.mrb[0].mxu0
    %193 = vdwg.mxu0
    %v194 = vld [vmem:[%s3] sm:$0x1]
    %v195 = vld [vmem:[%s4] sm:$0x1]
    %196 = vadd.xlane.f32.xlu0 %v188
    %v197 = vpop.xlane.xlu0 %196
    %198 = vadd.xlane.f32.xlu0 %v191
    %v199 = vpop.xlane.xlu0 %198
    %v200 = vmul.f32 %v197, 0.015625
    %v201 = vmul.f32 %v199, 0.015625
    %v202 = vmul.f32 %v188, %v188
    %v203 = vmul.f32 %v191, %v191
    %204 = vadd.xlane.f32.xlu0 %v202
    %v205 = vpop.xlane.xlu0 %204
    %206 = vadd.xlane.f32.xlu0 %v203
    %v207 = vpop.xlane.xlu0 %206
    %v208 = vmul.f32 %v205, 0.015625
    %v209 = vmul.f32 %v207, 0.015625
    %v210 = vmul.f32 %v200, %v200
    %v211 = vmul.f32 %v201, %v201
    %v212 = vsub.f32 %v208, %v210
    %v213 = vsub.f32 %v209, %v211
    %v214 = vmax.f32 %v212, 0.0
    %v215 = vmax.f32 %v213, 0.0
    %v216 = vadd.f32 %v214, 1e-05
    %v217 = vadd.f32 %v215, 1e-05
    %v218 = vrsqrt.pop %v216
    %v219 = vrsqrt.pop %v217
    %v221 = vlaneseq
    %v222 = vshrl.u32 %v221, 7
    %v223 = vsub.s32 0, %v222
    %v224 = vrot.slane %v194, %v223
    %v226 = vmul.f32 %v224, %v218
    %v227 = vmul.f32 %v224, %v219
    %v228 = vmul.f32 %v200, %v226
    %v229 = vmul.f32 %v201, %v227
    %v231 = vlaneseq
    %v232 = vshrl.u32 %v231, 7
    %v233 = vsub.s32 0, %v232
    %v234 = vrot.slane %v195, %v233
    %v236 = vsub.f32 %v234, %v228
    %v237 = vsub.f32 %v234, %v229
    %v238 = vmul.f32 %v188, %v226
    %v239 = vmul.f32 %v191, %v227
    %v240 = vadd.f32 %v238, %v236
    %v241 = vadd.f32 %v239, %v237
    %v242 = vmax.f32 %v240, 0.0
    %v243 = vmax.f32 %v241, 0.0
    %v244 = vpack.c.bf16 %v243, %v242
    %v245 = vld [vmem:[#allocation2] sm:$0xf]
    %v246 = vld [vmem:[#allocation2 + $0x4] sm:$0xf]
    %v247 = vld [vmem:[#allocation2 + $0x8] sm:$0xf]
    %v248 = vld [vmem:[#allocation2 + $0xc] sm:$0xf]
    %v249 = vld [vmem:[#allocation2 + $0x10] sm:$0xf]
    %v250 = vld [vmem:[#allocation2 + $0x14] sm:$0xf]
    %v251 = vld [vmem:[#allocation2 + $0x18] sm:$0xf]
    %v252 = vld [vmem:[#allocation2 + $0x1c] sm:$0xf]
    %v253 = vld [vmem:[#allocation2 + $0x20] sm:$0xf]
    %v254 = vld [vmem:[#allocation2 + $0x24] sm:$0xf]
    %v255 = vld [vmem:[#allocation2 + $0x28] sm:$0xf]
    %v256 = vld [vmem:[#allocation2 + $0x2c] sm:$0xf]
    %v257 = vld [vmem:[#allocation2 + $0x30] sm:$0xf]
    %v258 = vld [vmem:[#allocation2 + $0x34] sm:$0xf]
    %v259 = vld [vmem:[#allocation2 + $0x38] sm:$0xf]
    %v260 = vld [vmem:[#allocation2 + $0x3c] sm:$0xf]
    %v261 = vld [vmem:[%s6] sm:$0x1]
    %v263 = vlaneseq
    %v264 = vshrl.u32 %v263, 7
    %v265 = vsub.s32 0, %v264
    %v266 = vrot.slane %v261, %v265
    %v284 = vunpack.c.l.b16 %v245
    %v285 = vunpack.c.l.b16 %v246
    %v286 = vunpack.c.l.b16 %v247
    %v287 = vunpack.c.l.b16 %v248
    %v288 = vunpack.c.l.b16 %v249
    %v289 = vunpack.c.l.b16 %v250
    %v290 = vunpack.c.l.b16 %v251
    %v291 = vunpack.c.l.b16 %v252
    %v292 = vunpack.c.l.b16 %v253
    %v293 = vunpack.c.l.b16 %v254
    %v294 = vunpack.c.l.b16 %v255
    %v295 = vunpack.c.l.b16 %v256
    %v296 = vunpack.c.l.b16 %v257
    %v297 = vunpack.c.l.b16 %v258
    %v298 = vunpack.c.l.b16 %v259
    %v299 = vunpack.c.l.b16 %v260
    %v300 = vpack.c.b16 %v285, %v284
    %v301 = vpack.c.b16 %v287, %v286
    %v302 = vpack.c.b16 %v289, %v288
    %v303 = vpack.c.b16 %v291, %v290
    %v304 = vpack.c.b16 %v293, %v292
    %v305 = vpack.c.b16 %v295, %v294
    %v306 = vpack.c.b16 %v297, %v296
    %v307 = vpack.c.b16 %v299, %v298
    %316 = vmatprep.subr.bf16.mxu0 0
    %317 = vmatpush1.bf16.msra.mxu0 %v300
    %318 = vmatprep.subr.bf16.mxu0 0
    %319 = vmatpush1.bf16.msra.mxu0 %v301
    %320 = vmatprep.subr.bf16.mxu0 0
    %321 = vmatpush1.bf16.msra.mxu0 %v302
    %322 = vmatprep.subr.bf16.mxu0 0
    %323 = vmatpush1.bf16.msra.mxu0 %v303
    %324 = vmatprep.subr.bf16.mxu0 0
    %325 = vmatpush1.bf16.msra.mxu0 %v304
    %326 = vmatprep.subr.bf16.mxu0 0
    %327 = vmatpush1.bf16.msra.mxu0 %v305
    %328 = vmatprep.subr.bf16.mxu0 0
    %329 = vmatpush1.bf16.msra.mxu0 %v306
    %330 = vmatprep.subr.bf16.mxu0 0
    %331 = vmatpush1.bf16.msra.mxu0 %v307
    %332 = vmatprep.subr.bf16.mxu0 0
    %333 = vmatpush1.bf16.msra.mxu0 0
    %334 = vmatprep.subr.bf16.mxu0 0
    %335 = vmatpush1.bf16.msra.mxu0 0
    %336 = vmatprep.subr.bf16.mxu0 0
    %337 = vmatpush1.bf16.msra.mxu0 0
    %338 = vmatprep.subr.bf16.mxu0 0
    %339 = vmatpush1.bf16.msra.mxu0 0
    %340 = vmatprep.subr.bf16.mxu0 0
    %341 = vmatpush1.bf16.msra.mxu0 0
    %342 = vmatprep.subr.bf16.mxu0 0
    %343 = vmatpush1.bf16.msra.mxu0 0
    %344 = vmatprep.subr.bf16.mxu0 0
    %345 = vmatpush1.bf16.msra.mxu0 0
    %346 = vmatprep.subr.bf16.mxu0 0
    %347 = vmatpush1.bf16.msra.mxu0 0
    %348 = vmatprep.mubr.bf16.mxu0 0
    %349 = vmatmul.mubr.bf16.gmra.mrb[0].mxu0 %v244
    %v350 = vpop.f32.mrb[0].mxu0
    %v351 = vadd.f32 %v266, %v350
    %v352 = vpop.f32.mrb[0].mxu0
    %v353 = vpop.f32.mrb[0].mxu0
    %v354 = vadd.f32 %v266, %v353
    %v355 = vpop.f32.mrb[0].mxu0
    %356 = vdwg.mxu0
    %v357 = vld [vmem:[%s7] sm:$0x1]
    %v358 = vld [vmem:[%s8] sm:$0x1]
    %359 = vadd.xlane.f32.xlu0 %v351
    %v360 = vpop.xlane.xlu0 %359
    %361 = vadd.xlane.f32.xlu0 %v354
    %v362 = vpop.xlane.xlu0 %361
    %v363 = vmul.f32 %v360, 0.015625
    %v364 = vmul.f32 %v362, 0.015625
    %v365 = vmul.f32 %v351, %v351
    %v366 = vmul.f32 %v354, %v354
    %367 = vadd.xlane.f32.xlu0 %v365
    %v368 = vpop.xlane.xlu0 %367
    %369 = vadd.xlane.f32.xlu0 %v366
    %v370 = vpop.xlane.xlu0 %369
    %v371 = vmul.f32 %v368, 0.015625
    %v372 = vmul.f32 %v370, 0.015625
    %v373 = vmul.f32 %v363, %v363
    %v374 = vmul.f32 %v364, %v364
    %v375 = vsub.f32 %v371, %v373
    %v376 = vsub.f32 %v372, %v374
    %v377 = vmax.f32 %v375, 0.0
    %v378 = vmax.f32 %v376, 0.0
    %v379 = vadd.f32 %v377, 1e-05
    %v380 = vadd.f32 %v378, 1e-05
    %v381 = vrsqrt.pop %v379
    %v382 = vrsqrt.pop %v380
    %v384 = vlaneseq
    %v385 = vshrl.u32 %v384, 7
    %v386 = vsub.s32 0, %v385
    %v387 = vrot.slane %v357, %v386
    %v389 = vmul.f32 %v387, %v381
    %v390 = vmul.f32 %v387, %v382
    %v391 = vmul.f32 %v363, %v389
    %v392 = vmul.f32 %v364, %v390
    %v394 = vlaneseq
    %v395 = vshrl.u32 %v394, 7
    %v396 = vsub.s32 0, %v395
    %v397 = vrot.slane %v358, %v396
    %v399 = vsub.f32 %v397, %v391
    %v400 = vsub.f32 %v397, %v392
    %v401 = vmul.f32 %v351, %v389
    %v402 = vmul.f32 %v354, %v390
    %v403 = vadd.f32 %v401, %v399
    %v404 = vadd.f32 %v402, %v400
    %v405 = vmax.f32 %v403, 0.0
    %v406 = vmax.f32 %v404, 0.0
    %v407 = vpack.c.bf16 %v406, %v405
    %v408 = vld [vmem:[#allocation5] sm:$0xf]
    %v409 = vld [vmem:[#allocation5 + $0x4] sm:$0xf]
    %v410 = vld [vmem:[#allocation5 + $0x8] sm:$0xf]
    %v411 = vld [vmem:[#allocation5 + $0xc] sm:$0xf]
    %v412 = vld [vmem:[#allocation5 + $0x10] sm:$0xf]
    %v413 = vld [vmem:[#allocation5 + $0x14] sm:$0xf]
    %v414 = vld [vmem:[#allocation5 + $0x18] sm:$0xf]
    %v415 = vld [vmem:[#allocation5 + $0x1c] sm:$0xf]
    %v416 = vld [vmem:[#allocation5 + $0x20] sm:$0xf]
    %v417 = vld [vmem:[#allocation5 + $0x24] sm:$0xf]
    %v418 = vld [vmem:[#allocation5 + $0x28] sm:$0xf]
    %v419 = vld [vmem:[#allocation5 + $0x2c] sm:$0xf]
    %v420 = vld [vmem:[#allocation5 + $0x30] sm:$0xf]
    %v421 = vld [vmem:[#allocation5 + $0x34] sm:$0xf]
    %v422 = vld [vmem:[#allocation5 + $0x38] sm:$0xf]
    %v423 = vld [vmem:[#allocation5 + $0x3c] sm:$0xf]
    %v424 = vld [vmem:[%s10] sm:$0x1]
    %v426 = vlaneseq
    %v427 = vshrl.u32 %v426, 7
    %v428 = vsub.s32 0, %v427
    %v429 = vrot.slane %v424, %v428
    %v447 = vunpack.c.l.b16 %v408
    %v448 = vunpack.c.l.b16 %v409
    %v449 = vunpack.c.l.b16 %v410
    %v450 = vunpack.c.l.b16 %v411
    %v451 = vunpack.c.l.b16 %v412
    %v452 = vunpack.c.l.b16 %v413
    %v453 = vunpack.c.l.b16 %v414
    %v454 = vunpack.c.l.b16 %v415
    %v455 = vunpack.c.l.b16 %v416
    %v456 = vunpack.c.l.b16 %v417
    %v457 = vunpack.c.l.b16 %v418
    %v458 = vunpack.c.l.b16 %v419
    %v459 = vunpack.c.l.b16 %v420
    %v460 = vunpack.c.l.b16 %v421
    %v461 = vunpack.c.l.b16 %v422
    %v462 = vunpack.c.l.b16 %v423
    %v463 = vpack.c.b16 %v448, %v447
    %v464 = vpack.c.b16 %v450, %v449
    %v465 = vpack.c.b16 %v452, %v451
    %v466 = vpack.c.b16 %v454, %v453
    %v467 = vpack.c.b16 %v456, %v455
    %v468 = vpack.c.b16 %v458, %v457
    %v469 = vpack.c.b16 %v460, %v459
    %v470 = vpack.c.b16 %v462, %v461
    %479 = vmatprep.subr.bf16.mxu0 0
    %480 = vmatpush1.bf16.msra.mxu0 %v463
    %481 = vmatprep.subr.bf16.mxu0 0
    %482 = vmatpush1.bf16.msra.mxu0 %v464
    %483 = vmatprep.subr.bf16.mxu0 0
    %484 = vmatpush1.bf16.msra.mxu0 %v465
    %485 = vmatprep.subr.bf16.mxu0 0
    %486 = vmatpush1.bf16.msra.mxu0 %v466
    %487 = vmatprep.subr.bf16.mxu0 0
    %488 = vmatpush1.bf16.msra.mxu0 %v467
    %489 = vmatprep.subr.bf16.mxu0 0
    %490 = vmatpush1.bf16.msra.mxu0 %v468
    %491 = vmatprep.subr.bf16.mxu0 0
    %492 = vmatpush1.bf16.msra.mxu0 %v469
    %493 = vmatprep.subr.bf16.mxu0 0
    %494 = vmatpush1.bf16.msra.mxu0 %v470
    %495 = vmatprep.subr.bf16.mxu0 0
    %496 = vmatpush1.bf16.msra.mxu0 0
    %497 = vmatprep.subr.bf16.mxu0 0
    %498 = vmatpush1.bf16.msra.mxu0 0
    %499 = vmatprep.subr.bf16.mxu0 0
    %500 = vmatpush1.bf16.msra.mxu0 0
    %501 = vmatprep.subr.bf16.mxu0 0
    %502 = vmatpush1.bf16.msra.mxu0 0
    %503 = vmatprep.subr.bf16.mxu0 0
    %504 = vmatpush1.bf16.msra.mxu0 0
    %505 = vmatprep.subr.bf16.mxu0 0
    %506 = vmatpush1.bf16.msra.mxu0 0
    %507 = vmatprep.subr.bf16.mxu0 0
    %508 = vmatpush1.bf16.msra.mxu0 0
    %509 = vmatprep.subr.bf16.mxu0 0
    %510 = vmatpush1.bf16.msra.mxu0 0
    %511 = vmatprep.mubr.bf16.mxu0 0
    %512 = vmatmul.mubr.bf16.gmra.mrb[0].mxu0 %v407
    %v513 = vpop.f32.mrb[0].mxu0
    %v514 = vadd.f32 %v429, %v513
    %v515 = vpop.f32.mrb[0].mxu0
    %v516 = vpop.f32.mrb[0].mxu0
    %v517 = vadd.f32 %v429, %v516
    %v518 = vpop.f32.mrb[0].mxu0
    %519 = vdwg.mxu0
    %v520 = vld [vmem:[%s11] sm:$0x1]
    %v521 = vld [vmem:[%s12] sm:$0x1]
    %522 = vadd.xlane.f32.xlu0 %v514
    %v523 = vpop.xlane.xlu0 %522
    %524 = vadd.xlane.f32.xlu0 %v517
    %v525 = vpop.xlane.xlu0 %524
    %v526 = vmul.f32 %v523, 0.041666668
    %v527 = vmul.f32 %v525, 0.041666668
    %v528 = vmul.f32 %v514, %v514
    %v529 = vmul.f32 %v517, %v517
    %530 = vadd.xlane.f32.xlu0 %v528
    %v531 = vpop.xlane.xlu0 %530
    %532 = vadd.xlane.f32.xlu0 %v529
    %v533 = vpop.xlane.xlu0 %532
    %v534 = vmul.f32 %v531, 0.041666668
    %v535 = vmul.f32 %v533, 0.041666668
    %v536 = vmul.f32 %v526, %v526
    %v537 = vmul.f32 %v527, %v527
    %v538 = vsub.f32 %v534, %v536
    %v539 = vsub.f32 %v535, %v537
    %v540 = vmax.f32 %v538, 0.0
    %v541 = vmax.f32 %v539, 0.0
    %v542 = vadd.f32 %v540, 1e-05
    %v543 = vadd.f32 %v541, 1e-05
    %v544 = vrsqrt.pop %v542
    %v545 = vrsqrt.pop %v543
    %v547 = vlaneseq
    %v548 = vshrl.u32 %v547, 7
    %v549 = vsub.s32 0, %v548
    %v550 = vrot.slane %v520, %v549
    %v552 = vmul.f32 %v550, %v544
    %v553 = vmul.f32 %v550, %v545
    %v554 = vmul.f32 %v526, %v552
    %v555 = vmul.f32 %v527, %v553
    %v557 = vlaneseq
    %v558 = vshrl.u32 %v557, 7
    %v559 = vsub.s32 0, %v558
    %v560 = vrot.slane %v521, %v559
    %v562 = vsub.f32 %v560, %v554
    %v563 = vsub.f32 %v560, %v555
    %v564 = vmul.f32 %v514, %v552
    %v565 = vmul.f32 %v517, %v553
    %v566 = vadd.f32 %v564, %v562
    %v567 = vadd.f32 %v565, %v563
    %568 = vst [vmem:[#allocation7] sm:$0xff] %v566
    %569 = vst [vmem:[#allocation7 + $0x8] sm:$0xff] %v567
    // Predicated region
    $region62: #{_mlp_head_call.1} parent=1 // pred_check
      _
    $region63: #{_mlp_head_call.1} parent=1 // pred_check_branch
      %571 = sbr.rel (0) target = $region65
    $region64: #{_mlp_head_call.1} parent=1 // pred_region
      %s573 = ssub.s32 256, 256
      %574 = vsyncadd [#allocation4], %s573
      %s575 = sshll.u32 [#allocation7], 4
      %s576 = int_to_ptr.vmem [resolvable:$true] %s575
      %581 = dma.vmem_to_hbm [thread:$0]  %s576, 256, %s13, [#allocation4], 128, 128, 8
    $region65: #{_mlp_head_call.1} parent=1 // pred_fallthru
      _
    // Predicated region
    $region66: #{_mlp_head_call.1} parent=1 // pred_check
      _
    $region67: #{_mlp_head_call.1} parent=1 // pred_check_branch
      %583 = sbr.rel (0) target = $region69
    $region68: #{_mlp_head_call.1} parent=1 // pred_region
      %584 = dma.done [#allocation4], 256
    $region69: #{_mlp_head_call.1} parent=1 // pred_fallthru
      _
    %585 = vsyncpa [#allocation3], 1
    %586 = vsyncpa [#allocation6], 1
    %587 = vsyncpa [#allocation4], 1

</llo_original>
